<compile_context>
chip_gen: v6e
topology: v6e:2x2x1
jax: 0.10.0
libtpu: 0.0.40
codegen_flags: <defaults>
</compile_context>

<pallas_src>
import math
import numpy as np
import jax
import jax.numpy as jnp
from jax.experimental import pallas as pl
from jax.experimental.pallas import tpu as pltpu


def _round_up(x, m):
    return (x + m - 1) // m * m


def ffn_kernel(x_ref, w1_ref, b1_ref, w2_ref, b2_ref, o_ref, acc_ref):
    # x_ref:  (tm, D)      bf16   current M tile of the folded (B*S, D) input
    # w1_ref: (D, tdff)    bf16   dff-tile of first linear's weights (stored (in, out))
    # b1_ref: (1, tdff)    f32    dff-tile of first linear's bias
    # w2_ref: (tdff, D)    bf16   dff-tile of second linear's weights (stored (in, out))
    # b2_ref: (1, D)       f32    second linear's bias (grid-invariant)
    # o_ref:  (tm, D)             output tile (written once, on the last dff step)
    # acc_ref:(tm, D)      f32    VMEM accumulator, persists across the dff grid axis
    j = pl.program_id(1)

    @pl.when(j == 0)
    def _init():
        acc_ref[...] = jnp.zeros_like(acc_ref)

    # First linear (dff tile) + bias + ReLU; bf16 operands, f32 MXU accumulation.
    h = jnp.dot(x_ref[...], w1_ref[...], preferred_element_type=jnp.float32)
    h = jnp.maximum(h + b1_ref[...], 0.0)
    # Dropout is identity in eval mode.
    # TODO(synk): training-mode dropout on h here (pltpu.prng_seed / prng_random_bits).

    # Second linear: accumulate this dff tile's contribution (bf16 x bf16 -> f32).
    acc_ref[...] += jnp.dot(h.astype(w2_ref.dtype), w2_ref[...],
                            preferred_element_type=jnp.float32)

    @pl.when(j == pl.num_programs(1) - 1)
    def _finalize():
        o_ref[...] = (acc_ref[...] + b2_ref[...]).astype(o_ref.dtype)


def feedforward(x, params, *, compute_dtype=jnp.bfloat16):
    """x: (B, S, dmodel).
       params: w1 (dmodel, dff), b1 (1, dff), w2 (dff, dmodel), b2 (1, dmodel).
       Weights are stored (in, out), i.e. the transpose of torch's (out, in)."""
    B, S, D = x.shape
    DFF = params["w1"].shape[1]
    out_dtype = x.dtype
    M = B * S

    # ---- M tiling: MXU-friendly tiles; pad M; keep >= 2 parallel i steps when possible.
    if M >= 512:
        tm = 256
    elif M >= 256:
        tm = 128            # still MXU-sized, and gives >= 2 parallel steps (v7x)
    else:
        tm = _round_up(M, 8)  # tiny-M fallback (e.g. the test shape): single i step
    M_pad = _round_up(M, tm)

    # ---- dff tiling: hold W1/W2 fully resident when they fit a v7x-safe VMEM budget,
    # otherwise stream 512-wide dff tiles (reduction axis last in the grid).
    bpe = jnp.dtype(compute_dtype).itemsize
    weight_bytes = 2 * D * DFF * bpe          # W1 + W2 in compute dtype
    if 2 * weight_bytes <= 24 * 2**20:        # x2 for double-buffered input specs
        tdff = DFF
    else:
        tdff = 512
    assert DFF % tdff == 0, "dff must be divisible by the dff tile"

    # ---- wrapper-side layout + dtype plumbing.
    x2d = x.reshape(M, D).astype(compute_dtype)
    if M_pad != M:
        x2d = jnp.pad(x2d, ((0, M_pad - M), (0, 0)))
    w1 = params["w1"].astype(compute_dtype)
    w2 = params["w2"].astype(compute_dtype)
    b1 = params["b1"].astype(jnp.float32).reshape(1, DFF)
    b2 = params["b2"].astype(jnp.float32).reshape(1, D)

    grid = (M_pad // tm, DFF // tdff)

    # Advisory cost estimate for the XLA scheduler.
    out_bpe = jnp.dtype(out_dtype).itemsize
    cost = pl.CostEstimate(
        flops=int(4 * M_pad * D * DFF),
        transcendentals=0,
        bytes_accessed=int(M_pad * D * bpe            # x
                           + 2 * D * DFF * bpe        # W1 + W2
                           + (DFF + D) * 4            # biases
                           + M_pad * D * out_bpe))    # output

    # Explicit VMEM budget: double-buffered in/out tiles + f32 accumulator, with headroom.
    vmem_bytes = (2 * (tm * D + D * tdff + tdff + tdff * D + D) * bpe
                  + 2 * tm * D * out_bpe
                  + tm * D * 4)
    vmem_limit = int(min(max(2 * vmem_bytes, 32 * 2**20), 100 * 2**20))

    out2d = pl.pallas_call(
        ffn_kernel,
        out_shape=jax.ShapeDtypeStruct((M_pad, D), out_dtype),
        grid_spec=pltpu.PrefetchScalarGridSpec(
            num_scalar_prefetch=0,
            grid=grid,
            in_specs=[
                pl.BlockSpec((tm, D),    lambda i, j: (i, 0)),   # x tile
                pl.BlockSpec((D, tdff),  lambda i, j: (0, j)),   # W1 dff-tile
                pl.BlockSpec((1, tdff),  lambda i, j: (0, j)),   # b1 dff-tile
                pl.BlockSpec((tdff, D),  lambda i, j: (j, 0)),   # W2 dff-tile
                pl.BlockSpec((1, D),     lambda i, j: (0, 0)),   # b2 (invariant)
            ],
            out_specs=pl.BlockSpec((tm, D), lambda i, j: (i, 0)),
            scratch_shapes=[pltpu.VMEM((tm, D), jnp.float32)],
        ),
        compiler_params=pltpu.CompilerParams(
            dimension_semantics=("parallel", "arbitrary"),
            vmem_limit_bytes=vmem_limit),
        cost_estimate=cost,
    )(x2d, w1, b1, w2, b2)

    return out2d[:M].reshape(B, S, D)


def reference_ffn(x, params, compute_dtype=jnp.bfloat16):
    """Pure-JAX reference with the same precision recipe (bf16 operands, f32 accumulate)."""
    cd = compute_dtype
    h = jnp.dot(x.astype(cd), params["w1"].astype(cd),
                preferred_element_type=jnp.float32) + params["b1"]
    h = jnp.maximum(h, 0.0)
    out = jnp.dot(h.astype(cd), params["w2"].astype(cd),
                  preferred_element_type=jnp.float32) + params["b2"]
    return out.astype(x.dtype)


if __name__ == "__main__":
    batch, seq, dmodel = 2, 8, 32
    dff = 2048  # hardcoded in the PyTorch module

    key = jax.random.PRNGKey(0)
    k1, k2, k3, k4, kx = jax.random.split(key, 5)

    # nn.Linear default init: U(-1/sqrt(in_features), 1/sqrt(in_features))
    b1_bound = 1.0 / math.sqrt(dmodel)
    b2_bound = 1.0 / math.sqrt(dff)

    params = {
        "w1": jax.random.uniform(k1, (dmodel, dff), jnp.float32, -b1_bound, b1_bound),
        "b1": jax.random.uniform(k2, (1, dff), jnp.float32, -b1_bound, b1_bound),
        "w2": jax.random.uniform(k3, (dff, dmodel), jnp.float32, -b2_bound, b2_bound),
        "b2": jax.random.uniform(k4, (1, dmodel), jnp.float32, -b2_bound, b2_bound),
    }

    x = jax.random.normal(kx, (batch, seq, dmodel), jnp.float32)

    out = feedforward(x, params)
    out = jax.block_until_ready(out)
    assert out.shape == (batch, seq, dmodel)

    # Compare against a same-precision (bf16 operands, f32 accumulation) reference.
    ref = reference_ffn(x, params)
    np.testing.assert_allclose(np.asarray(out), np.asarray(ref), atol=5e-3, rtol=5e-2)

    print("KERNEL_OK")
</pallas_src>

<mosaic_0001>
module attributes {stable_mosaic.version = 11 : i64} {
  func.func @ffn_kernel(%arg0: i32, %arg1: i32, %arg2: memref<16x32xbf16, #tpu.memory_space<vmem>>, %arg3: memref<32x2048xbf16, #tpu.memory_space<vmem>>, %arg4: memref<1x2048xf32, #tpu.memory_space<vmem>>, %arg5: memref<2048x32xbf16, #tpu.memory_space<vmem>>, %arg6: memref<1x32xf32, #tpu.memory_space<vmem>>, %arg7: memref<16x32xf32, #tpu.memory_space<vmem>>, %arg8: memref<16x32xf32, #tpu.memory_space<vmem>>) attributes {dimension_semantics = [#tpu.dimension_semantics<parallel>, #tpu.dimension_semantics<arbitrary>], iteration_bounds = array<i64: 1, 1>, scalar_prefetch = 0 : i64, scratch_operands = 1 : i64, tpu.core_type = #tpu.core_type<tc>, window_params = [{transform_indices = @transform_0, window_bounds = array<i64: 16, 32>}, {transform_indices = @transform_1, window_bounds = array<i64: 32, 2048>}, {transform_indices = @transform_2, window_bounds = array<i64: 1, 2048>}, {transform_indices = @transform_3, window_bounds = array<i64: 2048, 32>}, {pipeline_mode = #tpu.pipeline_mode<synchronous>, transform_indices = @transform_4, window_bounds = array<i64: 1, 32>}, {transform_indices = @transform_5, window_bounds = array<i64: 16, 32>}]} {
    %c0_i32 = arith.constant 0 : i32
    %0 = arith.cmpi eq, %arg1, %c0_i32 : i32
    %1 = arith.extui %0 : i1 to i32
    %c0_i32_0 = arith.constant 0 : i32
    %2 = arith.cmpi ne, %1, %c0_i32_0 : i32
    scf.if %2 {
      %cst_16 = arith.constant 0.000000e+00 : f32
      %20 = vector.broadcast %cst_16 : f32 to vector<16x32xf32>
      %c0_17 = arith.constant 0 : index
      %c0_18 = arith.constant 0 : index
      %21 = vector.load %arg8[%c0_17, %c0_18] : memref<16x32xf32, #tpu.memory_space<vmem>>, vector<16x32xf32>
      tpu.vector_store %arg8[%c0_17, %c0_18], %20 {strides = array<i32>} : memref<16x32xf32, #tpu.memory_space<vmem>>, vector<16x32xf32>,
    } else {
    }
    %c0 = arith.constant 0 : index
    %c0_1 = arith.constant 0 : index
    %3 = vector.load %arg2[%c0, %c0_1] : memref<16x32xbf16, #tpu.memory_space<vmem>>, vector<16x32xbf16>
    %c0_2 = arith.constant 0 : index
    %c0_3 = arith.constant 0 : index
    %4 = vector.load %arg3[%c0_2, %c0_3] : memref<32x2048xbf16, #tpu.memory_space<vmem>>, vector<32x2048xbf16>
    %cst = arith.constant dense<0.000000e+00> : vector<16x2048xf32>
    %5 = tpu.matmul %3, %4, %cst {dimension_numbers = #tpu.dot_dimension_numbers<[1], [0], [0], [1], [0, 0, 1, 1], [], []>} : vector<16x32xbf16>, vector<32x2048xbf16>, vector<16x2048xf32> -> vector<16x2048xf32>
    %c0_4 = arith.constant 0 : index
    %c0_5 = arith.constant 0 : index
    %6 = vector.load %arg4[%c0_4, %c0_5] : memref<1x2048xf32, #tpu.memory_space<vmem>>, vector<1x2048xf32>
    %7 = vector.broadcast %6 : vector<1x2048xf32> to vector<16x2048xf32>
    %8 = arith.addf %5, %7 : vector<16x2048xf32>
    %cst_6 = arith.constant 0.000000e+00 : f32
    %9 = vector.broadcast %cst_6 : f32 to vector<16x2048xf32>
    %10 = arith.maximumf %8, %9 : vector<16x2048xf32>
    %c0_7 = arith.constant 0 : index
    %c0_8 = arith.constant 0 : index
    %11 = vector.load %arg8[%c0_7, %c0_8] : memref<16x32xf32, #tpu.memory_space<vmem>>, vector<16x32xf32>
    %12 = arith.truncf %10 : vector<16x2048xf32> to vector<16x2048xbf16>
    %c0_9 = arith.constant 0 : index
    %c0_10 = arith.constant 0 : index
    %13 = vector.load %arg5[%c0_9, %c0_10] : memref<2048x32xbf16, #tpu.memory_space<vmem>>, vector<2048x32xbf16>
    %cst_11 = arith.constant dense<0.000000e+00> : vector<16x32xf32>
    %14 = tpu.matmul %12, %13, %cst_11 {dimension_numbers = #tpu.dot_dimension_numbers<[1], [0], [0], [1], [0, 0, 1, 1], [], []>} : vector<16x2048xbf16>, vector<2048x32xbf16>, vector<16x32xf32> -> vector<16x32xf32>
    %15 = arith.addf %11, %14 : vector<16x32xf32>
    %c0_12 = arith.constant 0 : index
    %c0_13 = arith.constant 0 : index
    %16 = vector.load %arg8[%c0_12, %c0_13] : memref<16x32xf32, #tpu.memory_space<vmem>>, vector<16x32xf32>
    tpu.vector_store %arg8[%c0_12, %c0_13], %15 {strides = array<i32>} : memref<16x32xf32, #tpu.memory_space<vmem>>, vector<16x32xf32>,
    %c0_i32_14 = arith.constant 0 : i32
    %17 = arith.cmpi eq, %arg1, %c0_i32_14 : i32
    %18 = arith.extui %17 : i1 to i32
    %c0_i32_15 = arith.constant 0 : i32
    %19 = arith.cmpi ne, %18, %c0_i32_15 : i32
    scf.if %19 {
      %c0_16 = arith.constant 0 : index
      %c0_17 = arith.constant 0 : index
      %20 = vector.load %arg8[%c0_16, %c0_17] : memref<16x32xf32, #tpu.memory_space<vmem>>, vector<16x32xf32>
      %c0_18 = arith.constant 0 : index
      %c0_19 = arith.constant 0 : index
      %21 = vector.load %arg6[%c0_18, %c0_19] : memref<1x32xf32, #tpu.memory_space<vmem>>, vector<1x32xf32>
      %22 = vector.broadcast %21 : vector<1x32xf32> to vector<16x32xf32>
      %23 = arith.addf %20, %22 : vector<16x32xf32>
      %c0_20 = arith.constant 0 : index
      %c0_21 = arith.constant 0 : index
      %24 = vector.load %arg7[%c0_20, %c0_21] : memref<16x32xf32, #tpu.memory_space<vmem>>, vector<16x32xf32>
      tpu.vector_store %arg7[%c0_20, %c0_21], %23 {strides = array<i32>} : memref<16x32xf32, #tpu.memory_space<vmem>>, vector<16x32xf32>,
    } else {
    }
    return
  }
  func.func @transform_0(%arg0: i32, %arg1: i32) -> (i32, i32) {
    %c0_i32 = arith.constant 0 : i32
    %c0_i32_0 = arith.constant 0 : i32
    return %arg0, %c0_i32 : i32, i32
  }
  func.func @transform_1(%arg0: i32, %arg1: i32) -> (i32, i32) {
    %c0_i32 = arith.constant 0 : i32
    %c0_i32_0 = arith.constant 0 : i32
    return %c0_i32, %arg1 : i32, i32
  }
  func.func @transform_2(%arg0: i32, %arg1: i32) -> (i32, i32) {
    %c0_i32 = arith.constant 0 : i32
    %c0_i32_0 = arith.constant 0 : i32
    return %c0_i32, %arg1 : i32, i32
  }
  func.func @transform_3(%arg0: i32, %arg1: i32) -> (i32, i32) {
    %c0_i32 = arith.constant 0 : i32
    %c0_i32_0 = arith.constant 0 : i32
    return %arg1, %c0_i32 : i32, i32
  }
  func.func @transform_4(%arg0: i32, %arg1: i32) -> (i32, i32) {
    %c0_i32 = arith.constant 0 : i32
    %c0_i32_0 = arith.constant 0 : i32
    %c0_i32_1 = arith.constant 0 : i32
    return %c0_i32, %c0_i32_0 : i32, i32
  }
  func.func @transform_5(%arg0: i32, %arg1: i32) -> (i32, i32) {
    %c0_i32 = arith.constant 0 : i32
    %c0_i32_0 = arith.constant 0 : i32
    return %arg0, %c0_i32 : i32, i32
  }
}

</mosaic_0001>

<llo_original>
// kernel: tpu_custom_call.1
$region0: #{tpu_custom_call.1}
  #allocation0 [shape = 'u32[]', space=smem, size = 0x4, offset = 0x4, fixed_abs, tag = 'smem constant byte address 0x4 - core index']
  #allocation1 [shape = 'u32[144,128]{1,0:T(1,128)}', space=vmem, size = 0x12000, scoped, tag = 'internal scratch']
  #allocation2 [shape = 'f32[16,32]{1,0:T(8,128)}', space=vmem, size = 0x2000, scoped, tag = 'scratch operand']
  %s0 = inlined_call_operand.vmem [shape: bf16[16,32], index: 0, kind: input, shape index: {}]
  %s1 = inlined_call_operand.vmem [shape: bf16[32,2048], index: 1, kind: input, shape index: {}]
  %s2 = inlined_call_operand.vmem [shape: f32[1,2048], index: 2, kind: input, shape index: {}]
  %s3 = inlined_call_operand.vmem [shape: bf16[2048,32], index: 3, kind: input, shape index: {}]
  %s4 = inlined_call_operand.vmem [shape: f32[1,32], index: 4, kind: input, shape index: {}]
  %s5 = inlined_call_operand.hbm [shape: f32[16,32], index: 5, kind: output, shape index: {}]
  %s6 = sld [smem:[#allocation0]]
  $region38: #{tpu_custom_call.1} parent=0
    _
  %s8 = ssub.s32 1, %s6
  %s9 = scalar_select 0, %s8, %s6
  $region1: #{tpu_custom_call.1} parent=0
    #allocation3 [shape = 'u8[8192]{0}', space=vmem, size = 0x2000, scoped, tag = 'output window, operand 0, single buffered']
    #allocation4 [shape = 's32[1]{0}', space=sflag, size = 0x4, scoped, tag = 'scoped memory for tpu_custom_call.1']
    %10 = vsyncpa [#allocation4], 0
    // Predicated region
    $region2: #{tpu_custom_call.1} parent=1 // pred_check
      _
    $region3: #{tpu_custom_call.1} parent=1 // pred_check_branch
      %12 = sbr.rel (0) target = $region5
    $region4: #{tpu_custom_call.1} parent=1 // pred_region
      _
    $region5: #{tpu_custom_call.1} parent=1 // pred_fallthru
      _
    // Predicated region
    $region6: #{tpu_custom_call.1} parent=1 // pred_check
      _
    $region7: #{tpu_custom_call.1} parent=1 // pred_check_branch
      %14 = sbr.rel (0) target = $region9
    $region8: #{tpu_custom_call.1} parent=1 // pred_region
      _
    $region9: #{tpu_custom_call.1} parent=1 // pred_fallthru
      _
    // Predicated region
    $region10: #{tpu_custom_call.1} parent=1 // pred_check
      _
    $region11: #{tpu_custom_call.1} parent=1 // pred_check_branch
      %16 = sbr.rel (0) target = $region13
    $region12: #{tpu_custom_call.1} parent=1 // pred_region
      _
    $region13: #{tpu_custom_call.1} parent=1 // pred_fallthru
      _
    // Predicated region
    $region14: #{tpu_custom_call.1} parent=1 // pred_check
      _
    $region15: #{tpu_custom_call.1} parent=1 // pred_check_branch
      %18 = sbr.rel (0) target = $region17
    $region16: #{tpu_custom_call.1} parent=1 // pred_region
      _
    $region17: #{tpu_custom_call.1} parent=1 // pred_fallthru
      _
    // Predicated region
    $region18: #{tpu_custom_call.1} parent=1 // pred_check
      _
    $region19: #{tpu_custom_call.1} parent=1 // pred_check_branch
      %20 = sbr.rel (0) target = $region21
    $region20: #{tpu_custom_call.1} parent=1 // pred_region
      _
    $region21: #{tpu_custom_call.1} parent=1 // pred_fallthru
      _
    %p22 = scmp.eq.s32.totalorder 0, 0
    // Predicated region
    $region22: #{tpu_custom_call.1} parent=1 // pred_check
      %p23 = pneg %p22
    $region23: #{tpu_custom_call.1} parent=1 // pred_check_branch
      %25 = sbr.rel (%p23) target = $region25
    $region24: #{tpu_custom_call.1} parent=1 // pred_region
      %vm26 = vcmask 261120
      %27 = vst.msk [vmem:[#allocation2] sm:$0xff] %vm26, 0.0
      %28 = vst.msk [vmem:[#allocation2 + $0x8] sm:$0xff] %vm26, 0.0
    $region25: #{tpu_custom_call.1} parent=1 // pred_fallthru
      _
    %v29 = vld [vmem:[%s0] sm:$0xf]
    %v30 = vld [vmem:[%s0 + $0x4] sm:$0xf]
    %v31 = vld [vmem:[%s1] sm:$0xff]
    %v32 = vld [vmem:[%s1 + $0x8] sm:$0xff]
    %v33 = vld [vmem:[%s1 + $0x10] sm:$0xff]
    %v34 = vld [vmem:[%s1 + $0x18] sm:$0xff]
    %v35 = vld [vmem:[%s1 + $0x20] sm:$0xff]
    %v36 = vld [vmem:[%s1 + $0x28] sm:$0xff]
    %v37 = vld [vmem:[%s1 + $0x30] sm:$0xff]
    %v38 = vld [vmem:[%s1 + $0x38] sm:$0xff]
    %v39 = vld [vmem:[%s1 + $0x40] sm:$0xff]
    %v40 = vld [vmem:[%s1 + $0x48] sm:$0xff]
    %v41 = vld [vmem:[%s1 + $0x50] sm:$0xff]
    %v42 = vld [vmem:[%s1 + $0x58] sm:$0xff]
    %v43 = vld [vmem:[%s1 + $0x60] sm:$0xff]
    %v44 = vld [vmem:[%s1 + $0x68] sm:$0xff]
    %v45 = vld [vmem:[%s1 + $0x70] sm:$0xff]
    %v46 = vld [vmem:[%s1 + $0x78] sm:$0xff]
    %v47 = vld [vmem:[%s1 + $0x80] sm:$0xff]
    %v48 = vld [vmem:[%s1 + $0x88] sm:$0xff]
    %v49 = vld [vmem:[%s1 + $0x90] sm:$0xff]
    %v50 = vld [vmem:[%s1 + $0x98] sm:$0xff]
    %v51 = vld [vmem:[%s1 + $0xa0] sm:$0xff]
    %v52 = vld [vmem:[%s1 + $0xa8] sm:$0xff]
    %v53 = vld [vmem:[%s1 + $0xb0] sm:$0xff]
    %v54 = vld [vmem:[%s1 + $0xb8] sm:$0xff]
    %v55 = vld [vmem:[%s1 + $0xc0] sm:$0xff]
    %v56 = vld [vmem:[%s1 + $0xc8] sm:$0xff]
    %v57 = vld [vmem:[%s1 + $0xd0] sm:$0xff]
    %v58 = vld [vmem:[%s1 + $0xd8] sm:$0xff]
    %v59 = vld [vmem:[%s1 + $0xe0] sm:$0xff]
    %v60 = vld [vmem:[%s1 + $0xe8] sm:$0xff]
    %v61 = vld [vmem:[%s1 + $0xf0] sm:$0xff]
    %v62 = vld [vmem:[%s1 + $0xf8] sm:$0xff]
    %v63 = vld [vmem:[%s2] sm:$0xff]
    %v64 = vld [vmem:[%s2 + $0x8] sm:$0xff]
    %v67 = vlaneseq
    %v68 = vshrl.u32 %v67, 7
    %v69 = vsub.s32 0, %v68
    %v70 = vrot.slane %v63, %v69
    %v71 = vlaneseq
    %v72 = vshrl.u32 %v71, 7
    %v73 = vsub.s32 1, %v72
    %v74 = vrot.slane %v63, %v73
    %v75 = vlaneseq
    %v76 = vshrl.u32 %v75, 7
    %v77 = vsub.s32 2, %v76
    %v78 = vrot.slane %v63, %v77
    %v79 = vlaneseq
    %v80 = vshrl.u32 %v79, 7
    %v81 = vsub.s32 3, %v80
    %v82 = vrot.slane %v63, %v81
    %v83 = vlaneseq
    %v84 = vshrl.u32 %v83, 7
    %v85 = vsub.s32 4, %v84
    %v86 = vrot.slane %v63, %v85
    %v87 = vlaneseq
    %v88 = vshrl.u32 %v87, 7
    %v89 = vsub.s32 5, %v88
    %v90 = vrot.slane %v63, %v89
    %v91 = vlaneseq
    %v92 = vshrl.u32 %v91, 7
    %v93 = vsub.s32 6, %v92
    %v94 = vrot.slane %v63, %v93
    %v95 = vlaneseq
    %v96 = vshrl.u32 %v95, 7
    %v97 = vsub.s32 7, %v96
    %v98 = vrot.slane %v63, %v97
    %v99 = vlaneseq
    %v100 = vshrl.u32 %v99, 7
    %v101 = vsub.s32 0, %v100
    %v102 = vrot.slane %v64, %v101
    %v103 = vlaneseq
    %v104 = vshrl.u32 %v103, 7
    %v105 = vsub.s32 1, %v104
    %v106 = vrot.slane %v64, %v105
    %v107 = vlaneseq
    %v108 = vshrl.u32 %v107, 7
    %v109 = vsub.s32 2, %v108
    %v110 = vrot.slane %v64, %v109
    %v111 = vlaneseq
    %v112 = vshrl.u32 %v111, 7
    %v113 = vsub.s32 3, %v112
    %v114 = vrot.slane %v64, %v113
    %v115 = vlaneseq
    %v116 = vshrl.u32 %v115, 7
    %v117 = vsub.s32 4, %v116
    %v118 = vrot.slane %v64, %v117
    %v119 = vlaneseq
    %v120 = vshrl.u32 %v119, 7
    %v121 = vsub.s32 5, %v120
    %v122 = vrot.slane %v64, %v121
    %v123 = vlaneseq
    %v124 = vshrl.u32 %v123, 7
    %v125 = vsub.s32 6, %v124
    %v126 = vrot.slane %v64, %v125
    %v127 = vlaneseq
    %v128 = vshrl.u32 %v127, 7
    %v129 = vsub.s32 7, %v128
    %v130 = vrot.slane %v64, %v129
    %v149 = vunpack.c.l.b16 %v29
    %v150 = vunpack.c.l.b16 %v30
    %v151 = vpack.c.b16 %v150, %v149
    %v184 = vunpack.c.l.b16 %v31
    %v185 = vunpack.c.h.b16 %v31
    %v186 = vunpack.c.l.b16 %v32
    %v187 = vunpack.c.h.b16 %v32
    %v188 = vunpack.c.l.b16 %v33
    %v189 = vunpack.c.h.b16 %v33
    %v190 = vunpack.c.l.b16 %v34
    %v191 = vunpack.c.h.b16 %v34
    %v192 = vunpack.c.l.b16 %v35
    %v193 = vunpack.c.h.b16 %v35
    %v194 = vunpack.c.l.b16 %v36
    %v195 = vunpack.c.h.b16 %v36
    %v196 = vunpack.c.l.b16 %v37
    %v197 = vunpack.c.h.b16 %v37
    %v198 = vunpack.c.l.b16 %v38
    %v199 = vunpack.c.h.b16 %v38
    %v200 = vunpack.c.l.b16 %v39
    %v201 = vunpack.c.h.b16 %v39
    %v202 = vunpack.c.l.b16 %v40
    %v203 = vunpack.c.h.b16 %v40
    %v204 = vunpack.c.l.b16 %v41
    %v205 = vunpack.c.h.b16 %v41
    %v206 = vunpack.c.l.b16 %v42
    %v207 = vunpack.c.h.b16 %v42
    %v208 = vunpack.c.l.b16 %v43
    %v209 = vunpack.c.h.b16 %v43
    %v210 = vunpack.c.l.b16 %v44
    %v211 = vunpack.c.h.b16 %v44
    %v212 = vunpack.c.l.b16 %v45
    %v213 = vunpack.c.h.b16 %v45
    %v214 = vunpack.c.l.b16 %v46
    %v215 = vunpack.c.h.b16 %v46
    %v216 = vunpack.c.l.b16 %v47
    %v217 = vunpack.c.h.b16 %v47
    %v218 = vunpack.c.l.b16 %v48
    %v219 = vunpack.c.h.b16 %v48
    %v220 = vunpack.c.l.b16 %v49
    %v221 = vunpack.c.h.b16 %v49
    %v222 = vunpack.c.l.b16 %v50
    %v223 = vunpack.c.h.b16 %v50
    %v224 = vunpack.c.l.b16 %v51
    %v225 = vunpack.c.h.b16 %v51
    %v226 = vunpack.c.l.b16 %v52
    %v227 = vunpack.c.h.b16 %v52
    %v228 = vunpack.c.l.b16 %v53
    %v229 = vunpack.c.h.b16 %v53
    %v230 = vunpack.c.l.b16 %v54
    %v231 = vunpack.c.h.b16 %v54
    %v232 = vunpack.c.l.b16 %v55
    %v233 = vunpack.c.h.b16 %v55
    %v234 = vunpack.c.l.b16 %v56
    %v235 = vunpack.c.h.b16 %v56
    %v236 = vunpack.c.l.b16 %v57
    %v237 = vunpack.c.h.b16 %v57
    %v238 = vunpack.c.l.b16 %v58
    %v239 = vunpack.c.h.b16 %v58
    %v240 = vunpack.c.l.b16 %v59
    %v241 = vunpack.c.h.b16 %v59
    %v242 = vunpack.c.l.b16 %v60
    %v243 = vunpack.c.h.b16 %v60
    %v244 = vunpack.c.l.b16 %v61
    %v245 = vunpack.c.h.b16 %v61
    %v246 = vunpack.c.l.b16 %v62
    %v247 = vunpack.c.h.b16 %v62
    %v248 = vpack.c.b16 %v200, %v184
    %v249 = vpack.c.b16 %v201, %v185
    %v250 = vpack.c.b16 %v202, %v186
    %v251 = vpack.c.b16 %v203, %v187
    %v252 = vpack.c.b16 %v204, %v188
    %v253 = vpack.c.b16 %v205, %v189
    %v254 = vpack.c.b16 %v206, %v190
    %v255 = vpack.c.b16 %v207, %v191
    %v256 = vpack.c.b16 %v208, %v192
    %v257 = vpack.c.b16 %v209, %v193
    %v258 = vpack.c.b16 %v210, %v194
    %v259 = vpack.c.b16 %v211, %v195
    %v260 = vpack.c.b16 %v212, %v196
    %v261 = vpack.c.b16 %v213, %v197
    %v262 = vpack.c.b16 %v214, %v198
    %v263 = vpack.c.b16 %v215, %v199
    %v264 = vpack.c.b16 %v232, %v216
    %v265 = vpack.c.b16 %v233, %v217
    %v266 = vpack.c.b16 %v234, %v218
    %v267 = vpack.c.b16 %v235, %v219
    %v268 = vpack.c.b16 %v236, %v220
    %v269 = vpack.c.b16 %v237, %v221
    %v270 = vpack.c.b16 %v238, %v222
    %v271 = vpack.c.b16 %v239, %v223
    %v272 = vpack.c.b16 %v240, %v224
    %v273 = vpack.c.b16 %v241, %v225
    %v274 = vpack.c.b16 %v242, %v226
    %v275 = vpack.c.b16 %v243, %v227
    %v276 = vpack.c.b16 %v244, %v228
    %v277 = vpack.c.b16 %v245, %v229
    %v278 = vpack.c.b16 %v246, %v230
    %v279 = vpack.c.b16 %v247, %v231
    %vm312 = vcmask 261120
    %v314 = vsel %vm312, %v151, 0
    %316 = vmatprep.subr.bf16.mxu0 0
    %317 = vmatpush1.bf16.msra.mxu0 0
    %318 = vmatprep.subr.bf16.mxu0 0
    %319 = vmatpush1.bf16.msra.mxu0 0
    %320 = vmatprep.subr.bf16.mxu0 0
    %321 = vmatpush1.bf16.msra.mxu0 0
    %322 = vmatprep.subr.bf16.mxu0 0
    %323 = vmatpush1.bf16.msra.mxu0 0
    %324 = vmatprep.subr.bf16.mxu0 0
    %325 = vmatpush1.bf16.msra.mxu0 0
    %326 = vmatprep.subr.bf16.mxu0 0
    %327 = vmatpush1.bf16.msra.mxu0 0
    %328 = vmatprep.subr.bf16.mxu0 %v265
    %329 = vmatpush1.bf16.msra.mxu0 %v264
    %330 = vmatprep.subr.bf16.mxu0 %v249
    %331 = vmatpush1.bf16.msra.mxu0 %v248
    %332 = vmatprep.subr.bf16.mxu0 0
    %333 = vmatpush2.bf16.msra.mxu0 0
    %334 = vmatprep.subr.bf16.mxu0 0
    %335 = vmatpush2.bf16.msra.mxu0 0
    %336 = vmatprep.subr.bf16.mxu0 0
    %337 = vmatpush2.bf16.msra.mxu0 0
    %338 = vmatprep.subr.bf16.mxu0 0
    %339 = vmatpush2.bf16.msra.mxu0 0
    %340 = vmatprep.subr.bf16.mxu0 0
    %341 = vmatpush2.bf16.msra.mxu0 0
    %342 = vmatprep.subr.bf16.mxu0 0
    %343 = vmatpush2.bf16.msra.mxu0 0
    %344 = vmatprep.subr.bf16.mxu0 0
    %345 = vmatpush2.bf16.msra.mxu0 0
    %346 = vmatprep.subr.bf16.mxu0 0
    %347 = vmatpush2.bf16.msra.mxu0 0
    %348 = vmatprep.mubr.bf16.mxu0 0
    %349 = vmatmul.mubr.bf16.gmra.mxu0 %v314
    %v350 = vpop.f32.mrf.mxu0
    %v351 = vadd.f32 %v70, %v350
    %v352 = vpop.f32.mrf.mxu0
    %v353 = vadd.f32 %v74, %v352
    %v354 = vpop.f32.mrf.mxu0
    %v355 = vadd.f32 %v70, %v354
    %v356 = vpop.f32.mrf.mxu0
    %v357 = vadd.f32 %v74, %v356
    %358 = vdwg.mxu0
    %359 = vmatprep.subr.bf16.mxu0 0
    %360 = vmatpush1.bf16.msra.mxu0 0
    %361 = vmatprep.subr.bf16.mxu0 0
    %362 = vmatpush1.bf16.msra.mxu0 0
    %363 = vmatprep.subr.bf16.mxu0 0
    %364 = vmatpush1.bf16.msra.mxu0 0
    %365 = vmatprep.subr.bf16.mxu0 0
    %366 = vmatpush1.bf16.msra.mxu0 0
    %367 = vmatprep.subr.bf16.mxu0 0
    %368 = vmatpush1.bf16.msra.mxu0 0
    %369 = vmatprep.subr.bf16.mxu0 0
    %370 = vmatpush1.bf16.msra.mxu0 0
    %371 = vmatprep.subr.bf16.mxu0 %v267
    %372 = vmatpush1.bf16.msra.mxu0 %v266
    %373 = vmatprep.subr.bf16.mxu0 %v251
    %374 = vmatpush1.bf16.msra.mxu0 %v250
    %375 = vmatprep.subr.bf16.mxu0 0
    %376 = vmatpush2.bf16.msra.mxu0 0
    %377 = vmatprep.subr.bf16.mxu0 0
    %378 = vmatpush2.bf16.msra.mxu0 0
    %379 = vmatprep.subr.bf16.mxu0 0
    %380 = vmatpush2.bf16.msra.mxu0 0
    %381 = vmatprep.subr.bf16.mxu0 0
    %382 = vmatpush2.bf16.msra.mxu0 0
    %383 = vmatprep.subr.bf16.mxu0 0
    %384 = vmatpush2.bf16.msra.mxu0 0
    %385 = vmatprep.subr.bf16.mxu0 0
    %386 = vmatpush2.bf16.msra.mxu0 0
    %387 = vmatprep.subr.bf16.mxu0 0
    %388 = vmatpush2.bf16.msra.mxu0 0
    %389 = vmatprep.subr.bf16.mxu0 0
    %390 = vmatpush2.bf16.msra.mxu0 0
    %391 = vmatprep.mubr.bf16.mxu0 0
    %392 = vmatmul.mubr.bf16.gmra.mxu0 %v314
    %v393 = vpop.f32.mrf.mxu0
    %v394 = vadd.f32 %v78, %v393
    %v395 = vpop.f32.mrf.mxu0
    %v396 = vadd.f32 %v82, %v395
    %v397 = vpop.f32.mrf.mxu0
    %v398 = vadd.f32 %v78, %v397
    %v399 = vpop.f32.mrf.mxu0
    %v400 = vadd.f32 %v82, %v399
    %401 = vdwg.mxu0
    %402 = vmatprep.subr.bf16.mxu0 0
    %403 = vmatpush1.bf16.msra.mxu0 0
    %404 = vmatprep.subr.bf16.mxu0 0
    %405 = vmatpush1.bf16.msra.mxu0 0
    %406 = vmatprep.subr.bf16.mxu0 0
    %407 = vmatpush1.bf16.msra.mxu0 0
    %408 = vmatprep.subr.bf16.mxu0 0
    %409 = vmatpush1.bf16.msra.mxu0 0
    %410 = vmatprep.subr.bf16.mxu0 0
    %411 = vmatpush1.bf16.msra.mxu0 0
    %412 = vmatprep.subr.bf16.mxu0 0
    %413 = vmatpush1.bf16.msra.mxu0 0
    %414 = vmatprep.subr.bf16.mxu0 %v269
    %415 = vmatpush1.bf16.msra.mxu0 %v268
    %416 = vmatprep.subr.bf16.mxu0 %v253
    %417 = vmatpush1.bf16.msra.mxu0 %v252
    %418 = vmatprep.subr.bf16.mxu0 0
    %419 = vmatpush2.bf16.msra.mxu0 0
    %420 = vmatprep.subr.bf16.mxu0 0
    %421 = vmatpush2.bf16.msra.mxu0 0
    %422 = vmatprep.subr.bf16.mxu0 0
    %423 = vmatpush2.bf16.msra.mxu0 0
    %424 = vmatprep.subr.bf16.mxu0 0
    %425 = vmatpush2.bf16.msra.mxu0 0
    %426 = vmatprep.subr.bf16.mxu0 0
    %427 = vmatpush2.bf16.msra.mxu0 0
    %428 = vmatprep.subr.bf16.mxu0 0
    %429 = vmatpush2.bf16.msra.mxu0 0
    %430 = vmatprep.subr.bf16.mxu0 0
    %431 = vmatpush2.bf16.msra.mxu0 0
    %432 = vmatprep.subr.bf16.mxu0 0
    %433 = vmatpush2.bf16.msra.mxu0 0
    %434 = vmatprep.mubr.bf16.mxu0 0
    %435 = vmatmul.mubr.bf16.gmra.mxu0 %v314
    %v436 = vpop.f32.mrf.mxu0
    %v437 = vadd.f32 %v86, %v436
    %v438 = vpop.f32.mrf.mxu0
    %v439 = vadd.f32 %v90, %v438
    %v440 = vpop.f32.mrf.mxu0
    %v441 = vadd.f32 %v86, %v440
    %v442 = vpop.f32.mrf.mxu0
    %v443 = vadd.f32 %v90, %v442
    %444 = vdwg.mxu0
    %445 = vmatprep.subr.bf16.mxu0 0
    %446 = vmatpush1.bf16.msra.mxu0 0
    %447 = vmatprep.subr.bf16.mxu0 0
    %448 = vmatpush1.bf16.msra.mxu0 0
    %449 = vmatprep.subr.bf16.mxu0 0
    %450 = vmatpush1.bf16.msra.mxu0 0
    %451 = vmatprep.subr.bf16.mxu0 0
    %452 = vmatpush1.bf16.msra.mxu0 0
    %453 = vmatprep.subr.bf16.mxu0 0
    %454 = vmatpush1.bf16.msra.mxu0 0
    %455 = vmatprep.subr.bf16.mxu0 0
    %456 = vmatpush1.bf16.msra.mxu0 0
    %457 = vmatprep.subr.bf16.mxu0 %v271
    %458 = vmatpush1.bf16.msra.mxu0 %v270
    %459 = vmatprep.subr.bf16.mxu0 %v255
    %460 = vmatpush1.bf16.msra.mxu0 %v254
    %461 = vmatprep.subr.bf16.mxu0 0
    %462 = vmatpush2.bf16.msra.mxu0 0
    %463 = vmatprep.subr.bf16.mxu0 0
    %464 = vmatpush2.bf16.msra.mxu0 0
    %465 = vmatprep.subr.bf16.mxu0 0
    %466 = vmatpush2.bf16.msra.mxu0 0
    %467 = vmatprep.subr.bf16.mxu0 0
    %468 = vmatpush2.bf16.msra.mxu0 0
    %469 = vmatprep.subr.bf16.mxu0 0
    %470 = vmatpush2.bf16.msra.mxu0 0
    %471 = vmatprep.subr.bf16.mxu0 0
    %472 = vmatpush2.bf16.msra.mxu0 0
    %473 = vmatprep.subr.bf16.mxu0 0
    %474 = vmatpush2.bf16.msra.mxu0 0
    %475 = vmatprep.subr.bf16.mxu0 0
    %476 = vmatpush2.bf16.msra.mxu0 0
    %477 = vmatprep.mubr.bf16.mxu0 0
    %478 = vmatmul.mubr.bf16.gmra.mxu0 %v314
    %v479 = vpop.f32.mrf.mxu0
    %v480 = vadd.f32 %v94, %v479
    %v481 = vpop.f32.mrf.mxu0
    %v482 = vadd.f32 %v98, %v481
    %v483 = vpop.f32.mrf.mxu0
    %v484 = vadd.f32 %v94, %v483
    %v485 = vpop.f32.mrf.mxu0
    %v486 = vadd.f32 %v98, %v485
    %487 = vdwg.mxu0
    %488 = vmatprep.subr.bf16.mxu0 0
    %489 = vmatpush1.bf16.msra.mxu0 0
    %490 = vmatprep.subr.bf16.mxu0 0
    %491 = vmatpush1.bf16.msra.mxu0 0
    %492 = vmatprep.subr.bf16.mxu0 0
    %493 = vmatpush1.bf16.msra.mxu0 0
    %494 = vmatprep.subr.bf16.mxu0 0
    %495 = vmatpush1.bf16.msra.mxu0 0
    %496 = vmatprep.subr.bf16.mxu0 0
    %497 = vmatpush1.bf16.msra.mxu0 0
    %498 = vmatprep.subr.bf16.mxu0 0
    %499 = vmatpush1.bf16.msra.mxu0 0
    %500 = vmatprep.subr.bf16.mxu0 %v273
    %501 = vmatpush1.bf16.msra.mxu0 %v272
    %502 = vmatprep.subr.bf16.mxu0 %v257
    %503 = vmatpush1.bf16.msra.mxu0 %v256
    %504 = vmatprep.subr.bf16.mxu0 0
    %505 = vmatpush2.bf16.msra.mxu0 0
    %506 = vmatprep.subr.bf16.mxu0 0
    %507 = vmatpush2.bf16.msra.mxu0 0
    %508 = vmatprep.subr.bf16.mxu0 0
    %509 = vmatpush2.bf16.msra.mxu0 0
    %510 = vmatprep.subr.bf16.mxu0 0
    %511 = vmatpush2.bf16.msra.mxu0 0
    %512 = vmatprep.subr.bf16.mxu0 0
    %513 = vmatpush2.bf16.msra.mxu0 0
    %514 = vmatprep.subr.bf16.mxu0 0
    %515 = vmatpush2.bf16.msra.mxu0 0
    %516 = vmatprep.subr.bf16.mxu0 0
    %517 = vmatpush2.bf16.msra.mxu0 0
    %518 = vmatprep.subr.bf16.mxu0 0
    %519 = vmatpush2.bf16.msra.mxu0 0
    %520 = vmatprep.mubr.bf16.mxu0 0
    %521 = vmatmul.mubr.bf16.gmra.mxu0 %v314
    %v522 = vpop.f32.mrf.mxu0
    %v523 = vadd.f32 %v102, %v522
    %v524 = vpop.f32.mrf.mxu0
    %v525 = vadd.f32 %v106, %v524
    %v526 = vpop.f32.mrf.mxu0
    %v527 = vadd.f32 %v102, %v526
    %v528 = vpop.f32.mrf.mxu0
    %v529 = vadd.f32 %v106, %v528
    %530 = vdwg.mxu0
    %531 = vmatprep.subr.bf16.mxu0 0
    %532 = vmatpush1.bf16.msra.mxu0 0
    %533 = vmatprep.subr.bf16.mxu0 0
    %534 = vmatpush1.bf16.msra.mxu0 0
    %535 = vmatprep.subr.bf16.mxu0 0
    %536 = vmatpush1.bf16.msra.mxu0 0
    %537 = vmatprep.subr.bf16.mxu0 0
    %538 = vmatpush1.bf16.msra.mxu0 0
    %539 = vmatprep.subr.bf16.mxu0 0
    %540 = vmatpush1.bf16.msra.mxu0 0
    %541 = vmatprep.subr.bf16.mxu0 0
    %542 = vmatpush1.bf16.msra.mxu0 0
    %543 = vmatprep.subr.bf16.mxu0 %v275
    %544 = vmatpush1.bf16.msra.mxu0 %v274
    %545 = vmatprep.subr.bf16.mxu0 %v259
    %546 = vmatpush1.bf16.msra.mxu0 %v258
    %547 = vmatprep.subr.bf16.mxu0 0
    %548 = vmatpush2.bf16.msra.mxu0 0
    %549 = vmatprep.subr.bf16.mxu0 0
    %550 = vmatpush2.bf16.msra.mxu0 0
    %551 = vmatprep.subr.bf16.mxu0 0
    %552 = vmatpush2.bf16.msra.mxu0 0
    %553 = vmatprep.subr.bf16.mxu0 0
    %554 = vmatpush2.bf16.msra.mxu0 0
    %555 = vmatprep.subr.bf16.mxu0 0
    %556 = vmatpush2.bf16.msra.mxu0 0
    %557 = vmatprep.subr.bf16.mxu0 0
    %558 = vmatpush2.bf16.msra.mxu0 0
    %559 = vmatprep.subr.bf16.mxu0 0
    %560 = vmatpush2.bf16.msra.mxu0 0
    %561 = vmatprep.subr.bf16.mxu0 0
    %562 = vmatpush2.bf16.msra.mxu0 0
    %563 = vmatprep.mubr.bf16.mxu0 0
    %564 = vmatmul.mubr.bf16.gmra.mxu0 %v314
    %v565 = vpop.f32.mrf.mxu0
    %v566 = vadd.f32 %v110, %v565
    %v567 = vpop.f32.mrf.mxu0
    %v568 = vadd.f32 %v114, %v567
    %v569 = vpop.f32.mrf.mxu0
    %v570 = vadd.f32 %v110, %v569
    %v571 = vpop.f32.mrf.mxu0
    %v572 = vadd.f32 %v114, %v571
    %573 = vdwg.mxu0
    %574 = vmatprep.subr.bf16.mxu0 0
    %575 = vmatpush1.bf16.msra.mxu0 0
    %576 = vmatprep.subr.bf16.mxu0 0
    %577 = vmatpush1.bf16.msra.mxu0 0
    %578 = vmatprep.subr.bf16.mxu0 0
    %579 = vmatpush1.bf16.msra.mxu0 0
    %580 = vmatprep.subr.bf16.mxu0 0
    %581 = vmatpush1.bf16.msra.mxu0 0
    %582 = vmatprep.subr.bf16.mxu0 0
    %583 = vmatpush1.bf16.msra.mxu0 0
    %584 = vmatprep.subr.bf16.mxu0 0
    %585 = vmatpush1.bf16.msra.mxu0 0
    %586 = vmatprep.subr.bf16.mxu0 %v277
    %587 = vmatpush1.bf16.msra.mxu0 %v276
    %588 = vmatprep.subr.bf16.mxu0 %v261
    %589 = vmatpush1.bf16.msra.mxu0 %v260
    %590 = vmatprep.subr.bf16.mxu0 0
    %591 = vmatpush2.bf16.msra.mxu0 0
    %592 = vmatprep.subr.bf16.mxu0 0
    %593 = vmatpush2.bf16.msra.mxu0 0
    %594 = vmatprep.subr.bf16.mxu0 0
    %595 = vmatpush2.bf16.msra.mxu0 0
    %596 = vmatprep.subr.bf16.mxu0 0
    %597 = vmatpush2.bf16.msra.mxu0 0
    %598 = vmatprep.subr.bf16.mxu0 0
    %599 = vmatpush2.bf16.msra.mxu0 0
    %600 = vmatprep.subr.bf16.mxu0 0
    %601 = vmatpush2.bf16.msra.mxu0 0
    %602 = vmatprep.subr.bf16.mxu0 0
    %603 = vmatpush2.bf16.msra.mxu0 0
    %604 = vmatprep.subr.bf16.mxu0 0
    %605 = vmatpush2.bf16.msra.mxu0 0
    %606 = vmatprep.mubr.bf16.mxu0 0
    %607 = vmatmul.mubr.bf16.gmra.mxu0 %v314
    %v608 = vpop.f32.mrf.mxu0
    %v609 = vadd.f32 %v118, %v608
    %v610 = vpop.f32.mrf.mxu0
    %v611 = vadd.f32 %v122, %v610
    %v612 = vpop.f32.mrf.mxu0
    %v613 = vadd.f32 %v118, %v612
    %v614 = vpop.f32.mrf.mxu0
    %v615 = vadd.f32 %v122, %v614
    %616 = vdwg.mxu0
    %617 = vmatprep.subr.bf16.mxu0 0
    %618 = vmatpush1.bf16.msra.mxu0 0
    %619 = vmatprep.subr.bf16.mxu0 0
    %620 = vmatpush1.bf16.msra.mxu0 0
    %621 = vmatprep.subr.bf16.mxu0 0
    %622 = vmatpush1.bf16.msra.mxu0 0
    %623 = vmatprep.subr.bf16.mxu0 0
    %624 = vmatpush1.bf16.msra.mxu0 0
    %625 = vmatprep.subr.bf16.mxu0 0
    %626 = vmatpush1.bf16.msra.mxu0 0
    %627 = vmatprep.subr.bf16.mxu0 0
    %628 = vmatpush1.bf16.msra.mxu0 0
    %629 = vmatprep.subr.bf16.mxu0 %v279
    %630 = vmatpush1.bf16.msra.mxu0 %v278
    %631 = vmatprep.subr.bf16.mxu0 %v263
    %632 = vmatpush1.bf16.msra.mxu0 %v262
    %633 = vmatprep.subr.bf16.mxu0 0
    %634 = vmatpush2.bf16.msra.mxu0 0
    %635 = vmatprep.subr.bf16.mxu0 0
    %636 = vmatpush2.bf16.msra.mxu0 0
    %637 = vmatprep.subr.bf16.mxu0 0
    %638 = vmatpush2.bf16.msra.mxu0 0
    %639 = vmatprep.subr.bf16.mxu0 0
    %640 = vmatpush2.bf16.msra.mxu0 0
    %641 = vmatprep.subr.bf16.mxu0 0
    %642 = vmatpush2.bf16.msra.mxu0 0
    %643 = vmatprep.subr.bf16.mxu0 0
    %644 = vmatpush2.bf16.msra.mxu0 0
    %645 = vmatprep.subr.bf16.mxu0 0
    %646 = vmatpush2.bf16.msra.mxu0 0
    %647 = vmatprep.subr.bf16.mxu0 0
    %648 = vmatpush2.bf16.msra.mxu0 0
    %649 = vmatprep.mubr.bf16.mxu0 0
    %650 = vmatmul.mubr.bf16.gmra.mxu0 %v314
    %v651 = vpop.f32.mrf.mxu0
    %v652 = vadd.f32 %v126, %v651
    %v653 = vpop.f32.mrf.mxu0
    %v654 = vadd.f32 %v130, %v653
    %v655 = vpop.f32.mrf.mxu0
    %v656 = vadd.f32 %v126, %v655
    %v657 = vpop.f32.mrf.mxu0
    %v658 = vadd.f32 %v130, %v657
    %659 = vdwg.mxu0
    %v660 = vmax.f32 %v351, 0.0
    %v661 = vmax.f32 %v353, 0.0
    %v662 = vmax.f32 %v394, 0.0
    %v663 = vmax.f32 %v396, 0.0
    %v664 = vmax.f32 %v437, 0.0
    %v665 = vmax.f32 %v439, 0.0
    %v666 = vmax.f32 %v480, 0.0
    %v667 = vmax.f32 %v482, 0.0
    %v668 = vmax.f32 %v523, 0.0
    %v669 = vmax.f32 %v525, 0.0
    %v670 = vmax.f32 %v566, 0.0
    %v671 = vmax.f32 %v568, 0.0
    %v672 = vmax.f32 %v609, 0.0
    %v673 = vmax.f32 %v611, 0.0
    %v674 = vmax.f32 %v652, 0.0
    %v675 = vmax.f32 %v654, 0.0
    %v676 = vmax.f32 %v355, 0.0
    %v677 = vmax.f32 %v357, 0.0
    %v678 = vmax.f32 %v398, 0.0
    %v679 = vmax.f32 %v400, 0.0
    %v680 = vmax.f32 %v441, 0.0
    %v681 = vmax.f32 %v443, 0.0
    %v682 = vmax.f32 %v484, 0.0
    %v683 = vmax.f32 %v486, 0.0
    %v684 = vmax.f32 %v527, 0.0
    %v685 = vmax.f32 %v529, 0.0
    %v686 = vmax.f32 %v570, 0.0
    %v687 = vmax.f32 %v572, 0.0
    %v688 = vmax.f32 %v613, 0.0
    %v689 = vmax.f32 %v615, 0.0
    %v690 = vmax.f32 %v656, 0.0
    %v691 = vmax.f32 %v658, 0.0
    %v692 = vld [vmem:[#allocation2] sm:$0xff]
    %v693 = vld [vmem:[#allocation2 + $0x8] sm:$0xff]
    %v694 = vpack.c.bf16 %v676, %v660
    %v695 = vpack.c.bf16 %v677, %v661
    %v696 = vpack.c.bf16 %v678, %v662
    %v697 = vpack.c.bf16 %v679, %v663
    %v698 = vpack.c.bf16 %v680, %v664
    %v699 = vpack.c.bf16 %v681, %v665
    %v700 = vpack.c.bf16 %v682, %v666
    %v701 = vpack.c.bf16 %v683, %v667
    %v702 = vpack.c.bf16 %v684, %v668
    %v703 = vpack.c.bf16 %v685, %v669
    %v704 = vpack.c.bf16 %v686, %v670
    %v705 = vpack.c.bf16 %v687, %v671
    %v706 = vpack.c.bf16 %v688, %v672
    %v707 = vpack.c.bf16 %v689, %v673
    %v708 = vpack.c.bf16 %v690, %v674
    %v709 = vpack.c.bf16 %v691, %v675
    %v710 = vld [vmem:[%s3] sm:$0xf]
    %v711 = vld [vmem:[%s3 + $0x4] sm:$0xf]
    %v712 = vld [vmem:[%s3 + $0x8] sm:$0xf]
    %v713 = vld [vmem:[%s3 + $0xc] sm:$0xf]
    %v714 = vld [vmem:[%s3 + $0x10] sm:$0xf]
    %v715 = vld [vmem:[%s3 + $0x14] sm:$0xf]
    %v716 = vld [vmem:[%s3 + $0x18] sm:$0xf]
    %v717 = vld [vmem:[%s3 + $0x1c] sm:$0xf]
    %v718 = vld [vmem:[%s3 + $0x20] sm:$0xf]
    %v719 = vld [vmem:[%s3 + $0x24] sm:$0xf]
    %v720 = vld [vmem:[%s3 + $0x28] sm:$0xf]
    %v721 = vld [vmem:[%s3 + $0x2c] sm:$0xf]
    %v722 = vld [vmem:[%s3 + $0x30] sm:$0xf]
    %v723 = vld [vmem:[%s3 + $0x34] sm:$0xf]
    %v724 = vld [vmem:[%s3 + $0x38] sm:$0xf]
    %v725 = vld [vmem:[%s3 + $0x3c] sm:$0xf]
    %v726 = vld [vmem:[%s3 + $0x40] sm:$0xf]
    %v727 = vld [vmem:[%s3 + $0x44] sm:$0xf]
    %v728 = vld [vmem:[%s3 + $0x48] sm:$0xf]
    %v729 = vld [vmem:[%s3 + $0x4c] sm:$0xf]
    %v730 = vld [vmem:[%s3 + $0x50] sm:$0xf]
    %v731 = vld [vmem:[%s3 + $0x54] sm:$0xf]
    %v732 = vld [vmem:[%s3 + $0x58] sm:$0xf]
    %v733 = vld [vmem:[%s3 + $0x5c] sm:$0xf]
    %v734 = vld [vmem:[%s3 + $0x60] sm:$0xf]
    %v735 = vld [vmem:[%s3 + $0x64] sm:$0xf]
    %v736 = vld [vmem:[%s3 + $0x68] sm:$0xf]
    %v737 = vld [vmem:[%s3 + $0x6c] sm:$0xf]
    %v738 = vld [vmem:[%s3 + $0x70] sm:$0xf]
    %v739 = vld [vmem:[%s3 + $0x74] sm:$0xf]
    %v740 = vld [vmem:[%s3 + $0x78] sm:$0xf]
    %v741 = vld [vmem:[%s3 + $0x7c] sm:$0xf]
    %v742 = vld [vmem:[%s3 + $0x80] sm:$0xf]
    %v743 = vld [vmem:[%s3 + $0x84] sm:$0xf]
    %v744 = vld [vmem:[%s3 + $0x88] sm:$0xf]
    %v745 = vld [vmem:[%s3 + $0x8c] sm:$0xf]
    %v746 = vld [vmem:[%s3 + $0x90] sm:$0xf]
    %v747 = vld [vmem:[%s3 + $0x94] sm:$0xf]
    %v748 = vld [vmem:[%s3 + $0x98] sm:$0xf]
    %v749 = vld [vmem:[%s3 + $0x9c] sm:$0xf]
    %v750 = vld [vmem:[%s3 + $0xa0] sm:$0xf]
    %v751 = vld [vmem:[%s3 + $0xa4] sm:$0xf]
    %v752 = vld [vmem:[%s3 + $0xa8] sm:$0xf]
    %v753 = vld [vmem:[%s3 + $0xac] sm:$0xf]
    %v754 = vld [vmem:[%s3 + $0xb0] sm:$0xf]
    %v755 = vld [vmem:[%s3 + $0xb4] sm:$0xf]
    %v756 = vld [vmem:[%s3 + $0xb8] sm:$0xf]
    %v757 = vld [vmem:[%s3 + $0xbc] sm:$0xf]
    %v758 = vld [vmem:[%s3 + $0xc0] sm:$0xf]
    %v759 = vld [vmem:[%s3 + $0xc4] sm:$0xf]
    %v760 = vld [vmem:[%s3 + $0xc8] sm:$0xf]
    %v761 = vld [vmem:[%s3 + $0xcc] sm:$0xf]
    %v762 = vld [vmem:[%s3 + $0xd0] sm:$0xf]
    %v763 = vld [vmem:[%s3 + $0xd4] sm:$0xf]
    %v764 = vld [vmem:[%s3 + $0xd8] sm:$0xf]
    %v765 = vld [vmem:[%s3 + $0xdc] sm:$0xf]
    %v766 = vld [vmem:[%s3 + $0xe0] sm:$0xf]
    %v767 = vld [vmem:[%s3 + $0xe4] sm:$0xf]
    %v768 = vld [vmem:[%s3 + $0xe8] sm:$0xf]
    %v769 = vld [vmem:[%s3 + $0xec] sm:$0xf]
    %v770 = vld [vmem:[%s3 + $0xf0] sm:$0xf]
    %v771 = vld [vmem:[%s3 + $0xf4] sm:$0xf]
    %v772 = vld [vmem:[%s3 + $0xf8] sm:$0xf]
    %v773 = vld [vmem:[%s3 + $0xfc] sm:$0xf]
    %v774 = vld [vmem:[%s3 + $0x100] sm:$0xf]
    %v775 = vld [vmem:[%s3 + $0x104] sm:$0xf]
    %v776 = vld [vmem:[%s3 + $0x108] sm:$0xf]
    %v777 = vld [vmem:[%s3 + $0x10c] sm:$0xf]
    %v778 = vld [vmem:[%s3 + $0x110] sm:$0xf]
    %v779 = vld [vmem:[%s3 + $0x114] sm:$0xf]
    %v780 = vld [vmem:[%s3 + $0x118] sm:$0xf]
    %v781 = vld [vmem:[%s3 + $0x11c] sm:$0xf]
    %v782 = vld [vmem:[%s3 + $0x120] sm:$0xf]
    %v783 = vld [vmem:[%s3 + $0x124] sm:$0xf]
    %v784 = vld [vmem:[%s3 + $0x128] sm:$0xf]
    %v785 = vld [vmem:[%s3 + $0x12c] sm:$0xf]
    %v786 = vld [vmem:[%s3 + $0x130] sm:$0xf]
    %v787 = vld [vmem:[%s3 + $0x134] sm:$0xf]
    %v788 = vld [vmem:[%s3 + $0x138] sm:$0xf]
    %v789 = vld [vmem:[%s3 + $0x13c] sm:$0xf]
    %v790 = vld [vmem:[%s3 + $0x140] sm:$0xf]
    %v791 = vld [vmem:[%s3 + $0x144] sm:$0xf]
    %v792 = vld [vmem:[%s3 + $0x148] sm:$0xf]
    %v793 = vld [vmem:[%s3 + $0x14c] sm:$0xf]
    %v794 = vld [vmem:[%s3 + $0x150] sm:$0xf]
    %v795 = vld [vmem:[%s3 + $0x154] sm:$0xf]
    %v796 = vld [vmem:[%s3 + $0x158] sm:$0xf]
    %v797 = vld [vmem:[%s3 + $0x15c] sm:$0xf]
    %v798 = vld [vmem:[%s3 + $0x160] sm:$0xf]
    %v799 = vld [vmem:[%s3 + $0x164] sm:$0xf]
    %v800 = vld [vmem:[%s3 + $0x168] sm:$0xf]
    %v801 = vld [vmem:[%s3 + $0x16c] sm:$0xf]
    %v802 = vld [vmem:[%s3 + $0x170] sm:$0xf]
    %v803 = vld [vmem:[%s3 + $0x174] sm:$0xf]
    %v804 = vld [vmem:[%s3 + $0x178] sm:$0xf]
    %v805 = vld [vmem:[%s3 + $0x17c] sm:$0xf]
    %v806 = vld [vmem:[%s3 + $0x180] sm:$0xf]
    %v807 = vld [vmem:[%s3 + $0x184] sm:$0xf]
    %v808 = vld [vmem:[%s3 + $0x188] sm:$0xf]
    %v809 = vld [vmem:[%s3 + $0x18c] sm:$0xf]
    %v810 = vld [vmem:[%s3 + $0x190] sm:$0xf]
    %v811 = vld [vmem:[%s3 + $0x194] sm:$0xf]
    %v812 = vld [vmem:[%s3 + $0x198] sm:$0xf]
    %v813 = vld [vmem:[%s3 + $0x19c] sm:$0xf]
    %v814 = vld [vmem:[%s3 + $0x1a0] sm:$0xf]
    %v815 = vld [vmem:[%s3 + $0x1a4] sm:$0xf]
    %v816 = vld [vmem:[%s3 + $0x1a8] sm:$0xf]
    %v817 = vld [vmem:[%s3 + $0x1ac] sm:$0xf]
    %v818 = vld [vmem:[%s3 + $0x1b0] sm:$0xf]
    %v819 = vld [vmem:[%s3 + $0x1b4] sm:$0xf]
    %v820 = vld [vmem:[%s3 + $0x1b8] sm:$0xf]
    %v821 = vld [vmem:[%s3 + $0x1bc] sm:$0xf]
    %v822 = vld [vmem:[%s3 + $0x1c0] sm:$0xf]
    %v823 = vld [vmem:[%s3 + $0x1c4] sm:$0xf]
    %v824 = vld [vmem:[%s3 + $0x1c8] sm:$0xf]
    %v825 = vld [vmem:[%s3 + $0x1cc] sm:$0xf]
    %v826 = vld [vmem:[%s3 + $0x1d0] sm:$0xf]
    %v827 = vld [vmem:[%s3 + $0x1d4] sm:$0xf]
    %v828 = vld [vmem:[%s3 + $0x1d8] sm:$0xf]
    %v829 = vld [vmem:[%s3 + $0x1dc] sm:$0xf]
    %v830 = vld [vmem:[%s3 + $0x1e0] sm:$0xf]
    %v831 = vld [vmem:[%s3 + $0x1e4] sm:$0xf]
    %v832 = vld [vmem:[%s3 + $0x1e8] sm:$0xf]
    %v833 = vld [vmem:[%s3 + $0x1ec] sm:$0xf]
    %v834 = vld [vmem:[%s3 + $0x1f0] sm:$0xf]
    %v835 = vld [vmem:[%s3 + $0x1f4] sm:$0xf]
    %v836 = vld [vmem:[%s3 + $0x1f8] sm:$0xf]
    %v837 = vld [vmem:[%s3 + $0x1fc] sm:$0xf]
    %v838 = vld [vmem:[%s3 + $0x200] sm:$0xf]
    %v839 = vld [vmem:[%s3 + $0x204] sm:$0xf]
    %v840 = vld [vmem:[%s3 + $0x208] sm:$0xf]
    %v841 = vld [vmem:[%s3 + $0x20c] sm:$0xf]
    %v842 = vld [vmem:[%s3 + $0x210] sm:$0xf]
    %v843 = vld [vmem:[%s3 + $0x214] sm:$0xf]
    %v844 = vld [vmem:[%s3 + $0x218] sm:$0xf]
    %v845 = vld [vmem:[%s3 + $0x21c] sm:$0xf]
    %v846 = vld [vmem:[%s3 + $0x220] sm:$0xf]
    %v847 = vld [vmem:[%s3 + $0x224] sm:$0xf]
    %v848 = vld [vmem:[%s3 + $0x228] sm:$0xf]
    %v849 = vld [vmem:[%s3 + $0x22c] sm:$0xf]
    %v850 = vld [vmem:[%s3 + $0x230] sm:$0xf]
    %v851 = vld [vmem:[%s3 + $0x234] sm:$0xf]
    %v852 = vld [vmem:[%s3 + $0x238] sm:$0xf]
    %v853 = vld [vmem:[%s3 + $0x23c] sm:$0xf]
    %v854 = vld [vmem:[%s3 + $0x240] sm:$0xf]
    %v855 = vld [vmem:[%s3 + $0x244] sm:$0xf]
    %v856 = vld [vmem:[%s3 + $0x248] sm:$0xf]
    %v857 = vld [vmem:[%s3 + $0x24c] sm:$0xf]
    %v858 = vld [vmem:[%s3 + $0x250] sm:$0xf]
    %v859 = vld [vmem:[%s3 + $0x254] sm:$0xf]
    %v860 = vld [vmem:[%s3 + $0x258] sm:$0xf]
    %v861 = vld [vmem:[%s3 + $0x25c] sm:$0xf]
    %v862 = vld [vmem:[%s3 + $0x260] sm:$0xf]
    %v863 = vld [vmem:[%s3 + $0x264] sm:$0xf]
    %v864 = vld [vmem:[%s3 + $0x268] sm:$0xf]
    %v865 = vld [vmem:[%s3 + $0x26c] sm:$0xf]
    %v866 = vld [vmem:[%s3 + $0x270] sm:$0xf]
    %v867 = vld [vmem:[%s3 + $0x274] sm:$0xf]
    %v868 = vld [vmem:[%s3 + $0x278] sm:$0xf]
    %v869 = vld [vmem:[%s3 + $0x27c] sm:$0xf]
    %v870 = vld [vmem:[%s3 + $0x280] sm:$0xf]
    %v871 = vld [vmem:[%s3 + $0x284] sm:$0xf]
    %v872 = vld [vmem:[%s3 + $0x288] sm:$0xf]
    %v873 = vld [vmem:[%s3 + $0x28c] sm:$0xf]
    %v874 = vld [vmem:[%s3 + $0x290] sm:$0xf]
    %v875 = vld [vmem:[%s3 + $0x294] sm:$0xf]
    %v876 = vld [vmem:[%s3 + $0x298] sm:$0xf]
    %v877 = vld [vmem:[%s3 + $0x29c] sm:$0xf]
    %v878 = vld [vmem:[%s3 + $0x2a0] sm:$0xf]
    %v879 = vld [vmem:[%s3 + $0x2a4] sm:$0xf]
    %v880 = vld [vmem:[%s3 + $0x2a8] sm:$0xf]
    %v881 = vld [vmem:[%s3 + $0x2ac] sm:$0xf]
    %v882 = vld [vmem:[%s3 + $0x2b0] sm:$0xf]
    %v883 = vld [vmem:[%s3 + $0x2b4] sm:$0xf]
    %v884 = vld [vmem:[%s3 + $0x2b8] sm:$0xf]
    %v885 = vld [vmem:[%s3 + $0x2bc] sm:$0xf]
    %v886 = vld [vmem:[%s3 + $0x2c0] sm:$0xf]
    %v887 = vld [vmem:[%s3 + $0x2c4] sm:$0xf]
    %v888 = vld [vmem:[%s3 + $0x2c8] sm:$0xf]
    %v889 = vld [vmem:[%s3 + $0x2cc] sm:$0xf]
    %v890 = vld [vmem:[%s3 + $0x2d0] sm:$0xf]
    %v891 = vld [vmem:[%s3 + $0x2d4] sm:$0xf]
    %v892 = vld [vmem:[%s3 + $0x2d8] sm:$0xf]
    %v893 = vld [vmem:[%s3 + $0x2dc] sm:$0xf]
    %v894 = vld [vmem:[%s3 + $0x2e0] sm:$0xf]
    %v895 = vld [vmem:[%s3 + $0x2e4] sm:$0xf]
    %v896 = vld [vmem:[%s3 + $0x2e8] sm:$0xf]
    %v897 = vld [vmem:[%s3 + $0x2ec] sm:$0xf]
    %v898 = vld [vmem:[%s3 + $0x2f0] sm:$0xf]
    %v899 = vld [vmem:[%s3 + $0x2f4] sm:$0xf]
    %v900 = vld [vmem:[%s3 + $0x2f8] sm:$0xf]
    %v901 = vld [vmem:[%s3 + $0x2fc] sm:$0xf]
    %v902 = vld [vmem:[%s3 + $0x300] sm:$0xf]
    %v903 = vld [vmem:[%s3 + $0x304] sm:$0xf]
    %v904 = vld [vmem:[%s3 + $0x308] sm:$0xf]
    %v905 = vld [vmem:[%s3 + $0x30c] sm:$0xf]
    %v906 = vld [vmem:[%s3 + $0x310] sm:$0xf]
    %v907 = vld [vmem:[%s3 + $0x314] sm:$0xf]
    %v908 = vld [vmem:[%s3 + $0x318] sm:$0xf]
    %v909 = vld [vmem:[%s3 + $0x31c] sm:$0xf]
    %v910 = vld [vmem:[%s3 + $0x320] sm:$0xf]
    %v911 = vld [vmem:[%s3 + $0x324] sm:$0xf]
    %v912 = vld [vmem:[%s3 + $0x328] sm:$0xf]
    %v913 = vld [vmem:[%s3 + $0x32c] sm:$0xf]
    %v914 = vld [vmem:[%s3 + $0x330] sm:$0xf]
    %v915 = vld [vmem:[%s3 + $0x334] sm:$0xf]
    %v916 = vld [vmem:[%s3 + $0x338] sm:$0xf]
    %v917 = vld [vmem:[%s3 + $0x33c] sm:$0xf]
    %v918 = vld [vmem:[%s3 + $0x340] sm:$0xf]
    %v919 = vld [vmem:[%s3 + $0x344] sm:$0xf]
    %v920 = vld [vmem:[%s3 + $0x348] sm:$0xf]
    %v921 = vld [vmem:[%s3 + $0x34c] sm:$0xf]
    %v922 = vld [vmem:[%s3 + $0x350] sm:$0xf]
    %v923 = vld [vmem:[%s3 + $0x354] sm:$0xf]
    %v924 = vld [vmem:[%s3 + $0x358] sm:$0xf]
    %v925 = vld [vmem:[%s3 + $0x35c] sm:$0xf]
    %v926 = vld [vmem:[%s3 + $0x360] sm:$0xf]
    %v927 = vld [vmem:[%s3 + $0x364] sm:$0xf]
    %v928 = vld [vmem:[%s3 + $0x368] sm:$0xf]
    %v929 = vld [vmem:[%s3 + $0x36c] sm:$0xf]
    %v930 = vld [vmem:[%s3 + $0x370] sm:$0xf]
    %v931 = vld [vmem:[%s3 + $0x374] sm:$0xf]
    %v932 = vld [vmem:[%s3 + $0x378] sm:$0xf]
    %v933 = vld [vmem:[%s3 + $0x37c] sm:$0xf]
    %v934 = vld [vmem:[%s3 + $0x380] sm:$0xf]
    %v935 = vld [vmem:[%s3 + $0x384] sm:$0xf]
    %v936 = vld [vmem:[%s3 + $0x388] sm:$0xf]
    %v937 = vld [vmem:[%s3 + $0x38c] sm:$0xf]
    %v938 = vld [vmem:[%s3 + $0x390] sm:$0xf]
    %v939 = vld [vmem:[%s3 + $0x394] sm:$0xf]
    %v940 = vld [vmem:[%s3 + $0x398] sm:$0xf]
    %v941 = vld [vmem:[%s3 + $0x39c] sm:$0xf]
    %v942 = vld [vmem:[%s3 + $0x3a0] sm:$0xf]
    %v943 = vld [vmem:[%s3 + $0x3a4] sm:$0xf]
    %v944 = vld [vmem:[%s3 + $0x3a8] sm:$0xf]
    %v945 = vld [vmem:[%s3 + $0x3ac] sm:$0xf]
    %v946 = vld [vmem:[%s3 + $0x3b0] sm:$0xf]
    %v947 = vld [vmem:[%s3 + $0x3b4] sm:$0xf]
    %v948 = vld [vmem:[%s3 + $0x3b8] sm:$0xf]
    %v949 = vld [vmem:[%s3 + $0x3bc] sm:$0xf]
    %v950 = vld [vmem:[%s3 + $0x3c0] sm:$0xf]
    %v951 = vld [vmem:[%s3 + $0x3c4] sm:$0xf]
    %v952 = vld [vmem:[%s3 + $0x3c8] sm:$0xf]
    %v953 = vld [vmem:[%s3 + $0x3cc] sm:$0xf]
    %v954 = vld [vmem:[%s3 + $0x3d0] sm:$0xf]
    %v955 = vld [vmem:[%s3 + $0x3d4] sm:$0xf]
    %v956 = vld [vmem:[%s3 + $0x3d8] sm:$0xf]
    %v957 = vld [vmem:[%s3 + $0x3dc] sm:$0xf]
    %v958 = vld [vmem:[%s3 + $0x3e0] sm:$0xf]
    %v959 = vld [vmem:[%s3 + $0x3e4] sm:$0xf]
    %v960 = vld [vmem:[%s3 + $0x3e8] sm:$0xf]
    %v961 = vld [vmem:[%s3 + $0x3ec] sm:$0xf]
    %v962 = vld [vmem:[%s3 + $0x3f0] sm:$0xf]
    %v963 = vld [vmem:[%s3 + $0x3f4] sm:$0xf]
    %v964 = vld [vmem:[%s3 + $0x3f8] sm:$0xf]
    %v965 = vld [vmem:[%s3 + $0x3fc] sm:$0xf]
    %v1222 = vunpack.c.l.b16 %v710
    %v1223 = vunpack.c.l.b16 %v711
    %v1224 = vunpack.c.l.b16 %v712
    %v1225 = vunpack.c.l.b16 %v713
    %v1226 = vunpack.c.l.b16 %v714
    %v1227 = vunpack.c.l.b16 %v715
    %v1228 = vunpack.c.l.b16 %v716
    %v1229 = vunpack.c.l.b16 %v717
    %v1230 = vunpack.c.l.b16 %v718
    %v1231 = vunpack.c.l.b16 %v719
    %v1232 = vunpack.c.l.b16 %v720
    %v1233 = vunpack.c.l.b16 %v721
    %v1234 = vunpack.c.l.b16 %v722
    %v1235 = vunpack.c.l.b16 %v723
    %v1236 = vunpack.c.l.b16 %v724
    %v1237 = vunpack.c.l.b16 %v725
    %v1238 = vunpack.c.l.b16 %v726
    %v1239 = vunpack.c.l.b16 %v727
    %v1240 = vunpack.c.l.b16 %v728
    %v1241 = vunpack.c.l.b16 %v729
    %v1242 = vunpack.c.l.b16 %v730
    %v1243 = vunpack.c.l.b16 %v731
    %v1244 = vunpack.c.l.b16 %v732
    %v1245 = vunpack.c.l.b16 %v733
    %v1246 = vunpack.c.l.b16 %v734
    %v1247 = vunpack.c.l.b16 %v735
    %v1248 = vunpack.c.l.b16 %v736
    %v1249 = vunpack.c.l.b16 %v737
    %v1250 = vunpack.c.l.b16 %v738
    %v1251 = vunpack.c.l.b16 %v739
    %v1252 = vunpack.c.l.b16 %v740
    %v1253 = vunpack.c.l.b16 %v741
    %v1254 = vunpack.c.l.b16 %v742
    %v1255 = vunpack.c.l.b16 %v743
    %v1256 = vunpack.c.l.b16 %v744
    %v1257 = vunpack.c.l.b16 %v745
    %v1258 = vunpack.c.l.b16 %v746
    %v1259 = vunpack.c.l.b16 %v747
    %v1260 = vunpack.c.l.b16 %v748
    %v1261 = vunpack.c.l.b16 %v749
    %v1262 = vunpack.c.l.b16 %v750
    %v1263 = vunpack.c.l.b16 %v751
    %v1264 = vunpack.c.l.b16 %v752
    %v1265 = vunpack.c.l.b16 %v753
    %v1266 = vunpack.c.l.b16 %v754
    %v1267 = vunpack.c.l.b16 %v755
    %v1268 = vunpack.c.l.b16 %v756
    %v1269 = vunpack.c.l.b16 %v757
    %v1270 = vunpack.c.l.b16 %v758
    %v1271 = vunpack.c.l.b16 %v759
    %v1272 = vunpack.c.l.b16 %v760
    %v1273 = vunpack.c.l.b16 %v761
    %v1274 = vunpack.c.l.b16 %v762
    %v1275 = vunpack.c.l.b16 %v763
    %v1276 = vunpack.c.l.b16 %v764
    %v1277 = vunpack.c.l.b16 %v765
    %v1278 = vunpack.c.l.b16 %v766
    %v1279 = vunpack.c.l.b16 %v767
    %v1280 = vunpack.c.l.b16 %v768
    %v1281 = vunpack.c.l.b16 %v769
    %v1282 = vunpack.c.l.b16 %v770
    %v1283 = vunpack.c.l.b16 %v771
    %v1284 = vunpack.c.l.b16 %v772
    %v1285 = vunpack.c.l.b16 %v773
    %v1286 = vunpack.c.l.b16 %v774
    %v1287 = vunpack.c.l.b16 %v775
    %v1288 = vunpack.c.l.b16 %v776
    %v1289 = vunpack.c.l.b16 %v777
    %v1290 = vunpack.c.l.b16 %v778
    %v1291 = vunpack.c.l.b16 %v779
    %v1292 = vunpack.c.l.b16 %v780
    %v1293 = vunpack.c.l.b16 %v781
    %v1294 = vunpack.c.l.b16 %v782
    %v1295 = vunpack.c.l.b16 %v783
    %v1296 = vunpack.c.l.b16 %v784
    %v1297 = vunpack.c.l.b16 %v785
    %v1298 = vunpack.c.l.b16 %v786
    %v1299 = vunpack.c.l.b16 %v787
    %v1300 = vunpack.c.l.b16 %v788
    %v1301 = vunpack.c.l.b16 %v789
    %v1302 = vunpack.c.l.b16 %v790
    %v1303 = vunpack.c.l.b16 %v791
    %v1304 = vunpack.c.l.b16 %v792
    %v1305 = vunpack.c.l.b16 %v793
    %v1306 = vunpack.c.l.b16 %v794
    %v1307 = vunpack.c.l.b16 %v795
    %v1308 = vunpack.c.l.b16 %v796
    %v1309 = vunpack.c.l.b16 %v797
    %v1310 = vunpack.c.l.b16 %v798
    %v1311 = vunpack.c.l.b16 %v799
    %v1312 = vunpack.c.l.b16 %v800
    %v1313 = vunpack.c.l.b16 %v801
    %v1314 = vunpack.c.l.b16 %v802
    %v1315 = vunpack.c.l.b16 %v803
    %v1316 = vunpack.c.l.b16 %v804
    %v1317 = vunpack.c.l.b16 %v805
    %v1318 = vunpack.c.l.b16 %v806
    %v1319 = vunpack.c.l.b16 %v807
    %v1320 = vunpack.c.l.b16 %v808
    %v1321 = vunpack.c.l.b16 %v809
    %v1322 = vunpack.c.l.b16 %v810
    %v1323 = vunpack.c.l.b16 %v811
    %v1324 = vunpack.c.l.b16 %v812
    %v1325 = vunpack.c.l.b16 %v813
    %v1326 = vunpack.c.l.b16 %v814
    %v1327 = vunpack.c.l.b16 %v815
    %v1328 = vunpack.c.l.b16 %v816
    %v1329 = vunpack.c.l.b16 %v817
    %v1330 = vunpack.c.l.b16 %v818
    %v1331 = vunpack.c.l.b16 %v819
    %v1332 = vunpack.c.l.b16 %v820
    %v1333 = vunpack.c.l.b16 %v821
    %v1334 = vunpack.c.l.b16 %v822
    %v1335 = vunpack.c.l.b16 %v823
    %v1336 = vunpack.c.l.b16 %v824
    %v1337 = vunpack.c.l.b16 %v825
    %v1338 = vunpack.c.l.b16 %v826
    %v1339 = vunpack.c.l.b16 %v827
    %v1340 = vunpack.c.l.b16 %v828
    %v1341 = vunpack.c.l.b16 %v829
    %v1342 = vunpack.c.l.b16 %v830
    %v1343 = vunpack.c.l.b16 %v831
    %v1344 = vunpack.c.l.b16 %v832
    %v1345 = vunpack.c.l.b16 %v833
    %v1346 = vunpack.c.l.b16 %v834
    %v1347 = vunpack.c.l.b16 %v835
    %v1348 = vunpack.c.l.b16 %v836
    %v1349 = vunpack.c.l.b16 %v837
    %v1350 = vunpack.c.l.b16 %v838
    %v1351 = vunpack.c.l.b16 %v839
    %v1352 = vunpack.c.l.b16 %v840
    %v1353 = vunpack.c.l.b16 %v841
    %v1354 = vunpack.c.l.b16 %v842
    %v1355 = vunpack.c.l.b16 %v843
    %v1356 = vunpack.c.l.b16 %v844
    %v1357 = vunpack.c.l.b16 %v845
    %v1358 = vunpack.c.l.b16 %v846
    %v1359 = vunpack.c.l.b16 %v847
    %v1360 = vunpack.c.l.b16 %v848
    %v1361 = vunpack.c.l.b16 %v849
    %v1362 = vunpack.c.l.b16 %v850
    %v1363 = vunpack.c.l.b16 %v851
    %v1364 = vunpack.c.l.b16 %v852
    %v1365 = vunpack.c.l.b16 %v853
    %v1366 = vunpack.c.l.b16 %v854
    %v1367 = vunpack.c.l.b16 %v855
    %v1368 = vunpack.c.l.b16 %v856
    %v1369 = vunpack.c.l.b16 %v857
    %v1370 = vunpack.c.l.b16 %v858
    %v1371 = vunpack.c.l.b16 %v859
    %v1372 = vunpack.c.l.b16 %v860
    %v1373 = vunpack.c.l.b16 %v861
    %v1374 = vunpack.c.l.b16 %v862
    %v1375 = vunpack.c.l.b16 %v863
    %v1376 = vunpack.c.l.b16 %v864
    %v1377 = vunpack.c.l.b16 %v865
    %v1378 = vunpack.c.l.b16 %v866
    %v1379 = vunpack.c.l.b16 %v867
    %v1380 = vunpack.c.l.b16 %v868
    %v1381 = vunpack.c.l.b16 %v869
    %v1382 = vunpack.c.l.b16 %v870
    %v1383 = vunpack.c.l.b16 %v871
    %v1384 = vunpack.c.l.b16 %v872
    %v1385 = vunpack.c.l.b16 %v873
    %v1386 = vunpack.c.l.b16 %v874
    %v1387 = vunpack.c.l.b16 %v875
    %v1388 = vunpack.c.l.b16 %v876
    %v1389 = vunpack.c.l.b16 %v877
    %v1390 = vunpack.c.l.b16 %v878
    %v1391 = vunpack.c.l.b16 %v879
    %v1392 = vunpack.c.l.b16 %v880
    %v1393 = vunpack.c.l.b16 %v881
    %v1394 = vunpack.c.l.b16 %v882
    %v1395 = vunpack.c.l.b16 %v883
    %v1396 = vunpack.c.l.b16 %v884
    %v1397 = vunpack.c.l.b16 %v885
    %v1398 = vunpack.c.l.b16 %v886
    %v1399 = vunpack.c.l.b16 %v887
    %v1400 = vunpack.c.l.b16 %v888
    %v1401 = vunpack.c.l.b16 %v889
    %v1402 = vunpack.c.l.b16 %v890
    %v1403 = vunpack.c.l.b16 %v891
    %v1404 = vunpack.c.l.b16 %v892
    %v1405 = vunpack.c.l.b16 %v893
    %v1406 = vunpack.c.l.b16 %v894
    %v1407 = vunpack.c.l.b16 %v895
    %v1408 = vunpack.c.l.b16 %v896
    %v1409 = vunpack.c.l.b16 %v897
    %v1410 = vunpack.c.l.b16 %v898
    %v1411 = vunpack.c.l.b16 %v899
    %v1412 = vunpack.c.l.b16 %v900
    %v1413 = vunpack.c.l.b16 %v901
    %v1414 = vunpack.c.l.b16 %v902
    %v1415 = vunpack.c.l.b16 %v903
    %v1416 = vunpack.c.l.b16 %v904
    %v1417 = vunpack.c.l.b16 %v905
    %v1418 = vunpack.c.l.b16 %v906
    %v1419 = vunpack.c.l.b16 %v907
    %v1420 = vunpack.c.l.b16 %v908
    %v1421 = vunpack.c.l.b16 %v909
    %v1422 = vunpack.c.l.b16 %v910
    %v1423 = vunpack.c.l.b16 %v911
    %v1424 = vunpack.c.l.b16 %v912
    %v1425 = vunpack.c.l.b16 %v913
    %v1426 = vunpack.c.l.b16 %v914
    %v1427 = vunpack.c.l.b16 %v915
    %v1428 = vunpack.c.l.b16 %v916
    %v1429 = vunpack.c.l.b16 %v917
    %v1430 = vunpack.c.l.b16 %v918
    %v1431 = vunpack.c.l.b16 %v919
    %v1432 = vunpack.c.l.b16 %v920
    %v1433 = vunpack.c.l.b16 %v921
    %v1434 = vunpack.c.l.b16 %v922
    %v1435 = vunpack.c.l.b16 %v923
    %v1436 = vunpack.c.l.b16 %v924
    %v1437 = vunpack.c.l.b16 %v925
    %v1438 = vunpack.c.l.b16 %v926
    %v1439 = vunpack.c.l.b16 %v927
    %v1440 = vunpack.c.l.b16 %v928
    %v1441 = vunpack.c.l.b16 %v929
    %v1442 = vunpack.c.l.b16 %v930
    %v1443 = vunpack.c.l.b16 %v931
    %v1444 = vunpack.c.l.b16 %v932
    %v1445 = vunpack.c.l.b16 %v933
    %v1446 = vunpack.c.l.b16 %v934
    %v1447 = vunpack.c.l.b16 %v935
    %v1448 = vunpack.c.l.b16 %v936
    %v1449 = vunpack.c.l.b16 %v937
    %v1450 = vunpack.c.l.b16 %v938
    %v1451 = vunpack.c.l.b16 %v939
    %v1452 = vunpack.c.l.b16 %v940
    %v1453 = vunpack.c.l.b16 %v941
    %v1454 = vunpack.c.l.b16 %v942
    %v1455 = vunpack.c.l.b16 %v943
    %v1456 = vunpack.c.l.b16 %v944
    %v1457 = vunpack.c.l.b16 %v945
    %v1458 = vunpack.c.l.b16 %v946
    %v1459 = vunpack.c.l.b16 %v947
    %v1460 = vunpack.c.l.b16 %v948
    %v1461 = vunpack.c.l.b16 %v949
    %v1462 = vunpack.c.l.b16 %v950
    %v1463 = vunpack.c.l.b16 %v951
    %v1464 = vunpack.c.l.b16 %v952
    %v1465 = vunpack.c.l.b16 %v953
    %v1466 = vunpack.c.l.b16 %v954
    %v1467 = vunpack.c.l.b16 %v955
    %v1468 = vunpack.c.l.b16 %v956
    %v1469 = vunpack.c.l.b16 %v957
    %v1470 = vunpack.c.l.b16 %v958
    %v1471 = vunpack.c.l.b16 %v959
    %v1472 = vunpack.c.l.b16 %v960
    %v1473 = vunpack.c.l.b16 %v961
    %v1474 = vunpack.c.l.b16 %v962
    %v1475 = vunpack.c.l.b16 %v963
    %v1476 = vunpack.c.l.b16 %v964
    %v1477 = vunpack.c.l.b16 %v965
    %v1478 = vpack.c.b16 %v1223, %v1222
    %v1479 = vpack.c.b16 %v1225, %v1224
    %v1480 = vpack.c.b16 %v1227, %v1226
    %v1481 = vpack.c.b16 %v1229, %v1228
    %v1482 = vpack.c.b16 %v1231, %v1230
    %v1483 = vpack.c.b16 %v1233, %v1232
    %v1484 = vpack.c.b16 %v1235, %v1234
    %v1485 = vpack.c.b16 %v1237, %v1236
    %v1486 = vpack.c.b16 %v1239, %v1238
    %v1487 = vpack.c.b16 %v1241, %v1240
    %v1488 = vpack.c.b16 %v1243, %v1242
    %v1489 = vpack.c.b16 %v1245, %v1244
    %v1490 = vpack.c.b16 %v1247, %v1246
    %v1491 = vpack.c.b16 %v1249, %v1248
    %v1492 = vpack.c.b16 %v1251, %v1250
    %v1493 = vpack.c.b16 %v1253, %v1252
    %v1494 = vpack.c.b16 %v1255, %v1254
    %v1495 = vpack.c.b16 %v1257, %v1256
    %v1496 = vpack.c.b16 %v1259, %v1258
    %v1497 = vpack.c.b16 %v1261, %v1260
    %v1498 = vpack.c.b16 %v1263, %v1262
    %v1499 = vpack.c.b16 %v1265, %v1264
    %v1500 = vpack.c.b16 %v1267, %v1266
    %v1501 = vpack.c.b16 %v1269, %v1268
    %v1502 = vpack.c.b16 %v1271, %v1270
    %v1503 = vpack.c.b16 %v1273, %v1272
    %v1504 = vpack.c.b16 %v1275, %v1274
    %v1505 = vpack.c.b16 %v1277, %v1276
    %v1506 = vpack.c.b16 %v1279, %v1278
    %v1507 = vpack.c.b16 %v1281, %v1280
    %v1508 = vpack.c.b16 %v1283, %v1282
    %v1509 = vpack.c.b16 %v1285, %v1284
    %v1510 = vpack.c.b16 %v1287, %v1286
    %v1511 = vpack.c.b16 %v1289, %v1288
    %v1512 = vpack.c.b16 %v1291, %v1290
    %v1513 = vpack.c.b16 %v1293, %v1292
    %v1514 = vpack.c.b16 %v1295, %v1294
    %v1515 = vpack.c.b16 %v1297, %v1296
    %v1516 = vpack.c.b16 %v1299, %v1298
    %v1517 = vpack.c.b16 %v1301, %v1300
    %v1518 = vpack.c.b16 %v1303, %v1302
    %v1519 = vpack.c.b16 %v1305, %v1304
    %v1520 = vpack.c.b16 %v1307, %v1306
    %v1521 = vpack.c.b16 %v1309, %v1308
    %v1522 = vpack.c.b16 %v1311, %v1310
    %v1523 = vpack.c.b16 %v1313, %v1312
    %v1524 = vpack.c.b16 %v1315, %v1314
    %v1525 = vpack.c.b16 %v1317, %v1316
    %v1526 = vpack.c.b16 %v1319, %v1318
    %v1527 = vpack.c.b16 %v1321, %v1320
    %v1528 = vpack.c.b16 %v1323, %v1322
    %v1529 = vpack.c.b16 %v1325, %v1324
    %v1530 = vpack.c.b16 %v1327, %v1326
    %v1531 = vpack.c.b16 %v1329, %v1328
    %v1532 = vpack.c.b16 %v1331, %v1330
    %v1533 = vpack.c.b16 %v1333, %v1332
    %v1534 = vpack.c.b16 %v1335, %v1334
    %v1535 = vpack.c.b16 %v1337, %v1336
    %v1536 = vpack.c.b16 %v1339, %v1338
    %v1537 = vpack.c.b16 %v1341, %v1340
    %v1538 = vpack.c.b16 %v1343, %v1342
    %v1539 = vpack.c.b16 %v1345, %v1344
    %v1540 = vpack.c.b16 %v1347, %v1346
    %v1541 = vpack.c.b16 %v1349, %v1348
    %v1542 = vpack.c.b16 %v1351, %v1350
    %v1543 = vpack.c.b16 %v1353, %v1352
    %v1544 = vpack.c.b16 %v1355, %v1354
    %v1545 = vpack.c.b16 %v1357, %v1356
    %v1546 = vpack.c.b16 %v1359, %v1358
    %v1547 = vpack.c.b16 %v1361, %v1360
    %v1548 = vpack.c.b16 %v1363, %v1362
    %v1549 = vpack.c.b16 %v1365, %v1364
    %v1550 = vpack.c.b16 %v1367, %v1366
    %v1551 = vpack.c.b16 %v1369, %v1368
    %v1552 = vpack.c.b16 %v1371, %v1370
    %v1553 = vpack.c.b16 %v1373, %v1372
    %v1554 = vpack.c.b16 %v1375, %v1374
    %v1555 = vpack.c.b16 %v1377, %v1376
    %v1556 = vpack.c.b16 %v1379, %v1378
    %v1557 = vpack.c.b16 %v1381, %v1380
    %v1558 = vpack.c.b16 %v1383, %v1382
    %v1559 = vpack.c.b16 %v1385, %v1384
    %v1560 = vpack.c.b16 %v1387, %v1386
    %v1561 = vpack.c.b16 %v1389, %v1388
    %v1562 = vpack.c.b16 %v1391, %v1390
    %v1563 = vpack.c.b16 %v1393, %v1392
    %v1564 = vpack.c.b16 %v1395, %v1394
    %v1565 = vpack.c.b16 %v1397, %v1396
    %v1566 = vpack.c.b16 %v1399, %v1398
    %v1567 = vpack.c.b16 %v1401, %v1400
    %v1568 = vpack.c.b16 %v1403, %v1402
    %v1569 = vpack.c.b16 %v1405, %v1404
    %v1570 = vpack.c.b16 %v1407, %v1406
    %v1571 = vpack.c.b16 %v1409, %v1408
    %v1572 = vpack.c.b16 %v1411, %v1410
    %v1573 = vpack.c.b16 %v1413, %v1412
    %v1574 = vpack.c.b16 %v1415, %v1414
    %v1575 = vpack.c.b16 %v1417, %v1416
    %v1576 = vpack.c.b16 %v1419, %v1418
    %v1577 = vpack.c.b16 %v1421, %v1420
    %v1578 = vpack.c.b16 %v1423, %v1422
    %v1579 = vpack.c.b16 %v1425, %v1424
    %v1580 = vpack.c.b16 %v1427, %v1426
    %v1581 = vpack.c.b16 %v1429, %v1428
    %v1582 = vpack.c.b16 %v1431, %v1430
    %v1583 = vpack.c.b16 %v1433, %v1432
    %v1584 = vpack.c.b16 %v1435, %v1434
    %v1585 = vpack.c.b16 %v1437, %v1436
    %v1586 = vpack.c.b16 %v1439, %v1438
    %v1587 = vpack.c.b16 %v1441, %v1440
    %v1588 = vpack.c.b16 %v1443, %v1442
    %v1589 = vpack.c.b16 %v1445, %v1444
    %v1590 = vpack.c.b16 %v1447, %v1446
    %v1591 = vpack.c.b16 %v1449, %v1448
    %v1592 = vpack.c.b16 %v1451, %v1450
    %v1593 = vpack.c.b16 %v1453, %v1452
    %v1594 = vpack.c.b16 %v1455, %v1454
    %v1595 = vpack.c.b16 %v1457, %v1456
    %v1596 = vpack.c.b16 %v1459, %v1458
    %v1597 = vpack.c.b16 %v1461, %v1460
    %v1598 = vpack.c.b16 %v1463, %v1462
    %v1599 = vpack.c.b16 %v1465, %v1464
    %v1600 = vpack.c.b16 %v1467, %v1466
    %v1601 = vpack.c.b16 %v1469, %v1468
    %v1602 = vpack.c.b16 %v1471, %v1470
    %v1603 = vpack.c.b16 %v1473, %v1472
    %v1604 = vpack.c.b16 %v1475, %v1474
    %v1605 = vpack.c.b16 %v1477, %v1476
    %1734 = vmatprep.subr.bf16.mxu0 0
    %1735 = vmatpush1.bf16.msra.mxu0 %v1485
    %1736 = vmatprep.subr.bf16.mxu0 0
    %1737 = vmatpush1.bf16.msra.mxu0 %v1484
    %1738 = vmatprep.subr.bf16.mxu0 0
    %1739 = vmatpush1.bf16.msra.mxu0 %v1483
    %1740 = vmatprep.subr.bf16.mxu0 0
    %1741 = vmatpush1.bf16.msra.mxu0 %v1482
    %1742 = vmatprep.subr.bf16.mxu0 0
    %1743 = vmatpush1.bf16.msra.mxu0 %v1481
    %1744 = vmatprep.subr.bf16.mxu0 0
    %1745 = vmatpush1.bf16.msra.mxu0 %v1480
    %1746 = vmatprep.subr.bf16.mxu0 0
    %1747 = vmatpush1.bf16.msra.mxu0 %v1479
    %1748 = vmatprep.subr.bf16.mxu0 0
    %1749 = vmatpush1.bf16.msra.mxu0 %v1478
    %1750 = vmatprep.subr.bf16.mxu0 0
    %1751 = vmatpush2.bf16.msra.mxu0 %v1493
    %1752 = vmatprep.subr.bf16.mxu0 0
    %1753 = vmatpush2.bf16.msra.mxu0 %v1492
    %1754 = vmatprep.subr.bf16.mxu0 0
    %1755 = vmatpush2.bf16.msra.mxu0 %v1491
    %1756 = vmatprep.subr.bf16.mxu0 0
    %1757 = vmatpush2.bf16.msra.mxu0 %v1490
    %1758 = vmatprep.subr.bf16.mxu0 0
    %1759 = vmatpush2.bf16.msra.mxu0 %v1489
    %1760 = vmatprep.subr.bf16.mxu0 0
    %1761 = vmatpush2.bf16.msra.mxu0 %v1488
    %1762 = vmatprep.subr.bf16.mxu0 0
    %1763 = vmatpush2.bf16.msra.mxu0 %v1487
    %1764 = vmatprep.subr.bf16.mxu0 0
    %1765 = vmatpush2.bf16.msra.mxu0 %v1486
    %1766 = vmatprep.mubr.bf16.mxu0 %v695
    %1767 = vmatmul.mubr.bf16.gmra.mxu0 %v694
    %v1768 = vpop.f32.mrf.mxu0
    %v1769 = vadd.f32 0.0, %v1768
    %v1770 = vpop.f32.mrf.mxu0
    %v1771 = vpop.f32.mrf.mxu0
    %v1772 = vadd.f32 0.0, %v1771
    %v1773 = vpop.f32.mrf.mxu0
    %1774 = vdwg.mxu0
    %1775 = vmatprep.subr.bf16.mxu0 0
    %1776 = vmatpush1.bf16.msra.mxu0 %v1501
    %1777 = vmatprep.subr.bf16.mxu0 0
    %1778 = vmatpush1.bf16.msra.mxu0 %v1500
    %1779 = vmatprep.subr.bf16.mxu0 0
    %1780 = vmatpush1.bf16.msra.mxu0 %v1499
    %1781 = vmatprep.subr.bf16.mxu0 0
    %1782 = vmatpush1.bf16.msra.mxu0 %v1498
    %1783 = vmatprep.subr.bf16.mxu0 0
    %1784 = vmatpush1.bf16.msra.mxu0 %v1497
    %1785 = vmatprep.subr.bf16.mxu0 0
    %1786 = vmatpush1.bf16.msra.mxu0 %v1496
    %1787 = vmatprep.subr.bf16.mxu0 0
    %1788 = vmatpush1.bf16.msra.mxu0 %v1495
    %1789 = vmatprep.subr.bf16.mxu0 0
    %1790 = vmatpush1.bf16.msra.mxu0 %v1494
    %1791 = vmatprep.subr.bf16.mxu0 0
    %1792 = vmatpush2.bf16.msra.mxu0 %v1509
    %1793 = vmatprep.subr.bf16.mxu0 0
    %1794 = vmatpush2.bf16.msra.mxu0 %v1508
    %1795 = vmatprep.subr.bf16.mxu0 0
    %1796 = vmatpush2.bf16.msra.mxu0 %v1507
    %1797 = vmatprep.subr.bf16.mxu0 0
    %1798 = vmatpush2.bf16.msra.mxu0 %v1506
    %1799 = vmatprep.subr.bf16.mxu0 0
    %1800 = vmatpush2.bf16.msra.mxu0 %v1505
    %1801 = vmatprep.subr.bf16.mxu0 0
    %1802 = vmatpush2.bf16.msra.mxu0 %v1504
    %1803 = vmatprep.subr.bf16.mxu0 0
    %1804 = vmatpush2.bf16.msra.mxu0 %v1503
    %1805 = vmatprep.subr.bf16.mxu0 0
    %1806 = vmatpush2.bf16.msra.mxu0 %v1502
    %1807 = vmatprep.mubr.bf16.mxu0 %v697
    %1808 = vmatmul.mubr.bf16.gmra.mxu0 %v696
    %v1809 = vpop.f32.mrf.mxu0
    %v1810 = vadd.f32 %v1769, %v1809
    %v1811 = vpop.f32.mrf.mxu0
    %v1812 = vpop.f32.mrf.mxu0
    %v1813 = vadd.f32 %v1772, %v1812
    %v1814 = vpop.f32.mrf.mxu0
    %1815 = vdwg.mxu0
    %1816 = vmatprep.subr.bf16.mxu0 0
    %1817 = vmatpush1.bf16.msra.mxu0 %v1517
    %1818 = vmatprep.subr.bf16.mxu0 0
    %1819 = vmatpush1.bf16.msra.mxu0 %v1516
    %1820 = vmatprep.subr.bf16.mxu0 0
    %1821 = vmatpush1.bf16.msra.mxu0 %v1515
    %1822 = vmatprep.subr.bf16.mxu0 0
    %1823 = vmatpush1.bf16.msra.mxu0 %v1514
    %1824 = vmatprep.subr.bf16.mxu0 0
    %1825 = vmatpush1.bf16.msra.mxu0 %v1513
    %1826 = vmatprep.subr.bf16.mxu0 0
    %1827 = vmatpush1.bf16.msra.mxu0 %v1512
    %1828 = vmatprep.subr.bf16.mxu0 0
    %1829 = vmatpush1.bf16.msra.mxu0 %v1511
    %1830 = vmatprep.subr.bf16.mxu0 0
    %1831 = vmatpush1.bf16.msra.mxu0 %v1510
    %1832 = vmatprep.subr.bf16.mxu0 0
    %1833 = vmatpush2.bf16.msra.mxu0 %v1525
    %1834 = vmatprep.subr.bf16.mxu0 0
    %1835 = vmatpush2.bf16.msra.mxu0 %v1524
    %1836 = vmatprep.subr.bf16.mxu0 0
    %1837 = vmatpush2.bf16.msra.mxu0 %v1523
    %1838 = vmatprep.subr.bf16.mxu0 0
    %1839 = vmatpush2.bf16.msra.mxu0 %v1522
    %1840 = vmatprep.subr.bf16.mxu0 0
    %1841 = vmatpush2.bf16.msra.mxu0 %v1521
    %1842 = vmatprep.subr.bf16.mxu0 0
    %1843 = vmatpush2.bf16.msra.mxu0 %v1520
    %1844 = vmatprep.subr.bf16.mxu0 0
    %1845 = vmatpush2.bf16.msra.mxu0 %v1519
    %1846 = vmatprep.subr.bf16.mxu0 0
    %1847 = vmatpush2.bf16.msra.mxu0 %v1518
    %1848 = vmatprep.mubr.bf16.mxu0 %v699
    %1849 = vmatmul.mubr.bf16.gmra.mxu0 %v698
    %v1850 = vpop.f32.mrf.mxu0
    %v1851 = vadd.f32 %v1810, %v1850
    %v1852 = vpop.f32.mrf.mxu0
    %v1853 = vpop.f32.mrf.mxu0
    %v1854 = vadd.f32 %v1813, %v1853
    %v1855 = vpop.f32.mrf.mxu0
    %1856 = vdwg.mxu0
    %1857 = vmatprep.subr.bf16.mxu0 0
    %1858 = vmatpush1.bf16.msra.mxu0 %v1533
    %1859 = vmatprep.subr.bf16.mxu0 0
    %1860 = vmatpush1.bf16.msra.mxu0 %v1532
    %1861 = vmatprep.subr.bf16.mxu0 0
    %1862 = vmatpush1.bf16.msra.mxu0 %v1531
    %1863 = vmatprep.subr.bf16.mxu0 0
    %1864 = vmatpush1.bf16.msra.mxu0 %v1530
    %1865 = vmatprep.subr.bf16.mxu0 0
    %1866 = vmatpush1.bf16.msra.mxu0 %v1529
    %1867 = vmatprep.subr.bf16.mxu0 0
    %1868 = vmatpush1.bf16.msra.mxu0 %v1528
    %1869 = vmatprep.subr.bf16.mxu0 0
    %1870 = vmatpush1.bf16.msra.mxu0 %v1527
    %1871 = vmatprep.subr.bf16.mxu0 0
    %1872 = vmatpush1.bf16.msra.mxu0 %v1526
    %1873 = vmatprep.subr.bf16.mxu0 0
    %1874 = vmatpush2.bf16.msra.mxu0 %v1541
    %1875 = vmatprep.subr.bf16.mxu0 0
    %1876 = vmatpush2.bf16.msra.mxu0 %v1540
    %1877 = vmatprep.subr.bf16.mxu0 0
    %1878 = vmatpush2.bf16.msra.mxu0 %v1539
    %1879 = vmatprep.subr.bf16.mxu0 0
    %1880 = vmatpush2.bf16.msra.mxu0 %v1538
    %1881 = vmatprep.subr.bf16.mxu0 0
    %1882 = vmatpush2.bf16.msra.mxu0 %v1537
    %1883 = vmatprep.subr.bf16.mxu0 0
    %1884 = vmatpush2.bf16.msra.mxu0 %v1536
    %1885 = vmatprep.subr.bf16.mxu0 0
    %1886 = vmatpush2.bf16.msra.mxu0 %v1535
    %1887 = vmatprep.subr.bf16.mxu0 0
    %1888 = vmatpush2.bf16.msra.mxu0 %v1534
    %1889 = vmatprep.mubr.bf16.mxu0 %v701
    %1890 = vmatmul.mubr.bf16.gmra.mxu0 %v700
    %v1891 = vpop.f32.mrf.mxu0
    %v1892 = vadd.f32 %v1851, %v1891
    %v1893 = vpop.f32.mrf.mxu0
    %v1894 = vpop.f32.mrf.mxu0
    %v1895 = vadd.f32 %v1854, %v1894
    %v1896 = vpop.f32.mrf.mxu0
    %1897 = vdwg.mxu0
    %1898 = vmatprep.subr.bf16.mxu0 0
    %1899 = vmatpush1.bf16.msra.mxu0 %v1549
    %1900 = vmatprep.subr.bf16.mxu0 0
    %1901 = vmatpush1.bf16.msra.mxu0 %v1548
    %1902 = vmatprep.subr.bf16.mxu0 0
    %1903 = vmatpush1.bf16.msra.mxu0 %v1547
    %1904 = vmatprep.subr.bf16.mxu0 0
    %1905 = vmatpush1.bf16.msra.mxu0 %v1546
    %1906 = vmatprep.subr.bf16.mxu0 0
    %1907 = vmatpush1.bf16.msra.mxu0 %v1545
    %1908 = vmatprep.subr.bf16.mxu0 0
    %1909 = vmatpush1.bf16.msra.mxu0 %v1544
    %1910 = vmatprep.subr.bf16.mxu0 0
    %1911 = vmatpush1.bf16.msra.mxu0 %v1543
    %1912 = vmatprep.subr.bf16.mxu0 0
    %1913 = vmatpush1.bf16.msra.mxu0 %v1542
    %1914 = vmatprep.subr.bf16.mxu0 0
    %1915 = vmatpush2.bf16.msra.mxu0 %v1557
    %1916 = vmatprep.subr.bf16.mxu0 0
    %1917 = vmatpush2.bf16.msra.mxu0 %v1556
    %1918 = vmatprep.subr.bf16.mxu0 0
    %1919 = vmatpush2.bf16.msra.mxu0 %v1555
    %1920 = vmatprep.subr.bf16.mxu0 0
    %1921 = vmatpush2.bf16.msra.mxu0 %v1554
    %1922 = vmatprep.subr.bf16.mxu0 0
    %1923 = vmatpush2.bf16.msra.mxu0 %v1553
    %1924 = vmatprep.subr.bf16.mxu0 0
    %1925 = vmatpush2.bf16.msra.mxu0 %v1552
    %1926 = vmatprep.subr.bf16.mxu0 0
    %1927 = vmatpush2.bf16.msra.mxu0 %v1551
    %1928 = vmatprep.subr.bf16.mxu0 0
    %1929 = vmatpush2.bf16.msra.mxu0 %v1550
    %1930 = vmatprep.mubr.bf16.mxu0 %v703
    %1931 = vmatmul.mubr.bf16.gmra.mxu0 %v702
    %v1932 = vpop.f32.mrf.mxu0
    %v1933 = vadd.f32 %v1892, %v1932
    %v1934 = vpop.f32.mrf.mxu0
    %v1935 = vpop.f32.mrf.mxu0
    %v1936 = vadd.f32 %v1895, %v1935
    %v1937 = vpop.f32.mrf.mxu0
    %1938 = vdwg.mxu0
    %1939 = vmatprep.subr.bf16.mxu0 0
    %1940 = vmatpush1.bf16.msra.mxu0 %v1565
    %1941 = vmatprep.subr.bf16.mxu0 0
    %1942 = vmatpush1.bf16.msra.mxu0 %v1564
    %1943 = vmatprep.subr.bf16.mxu0 0
    %1944 = vmatpush1.bf16.msra.mxu0 %v1563
    %1945 = vmatprep.subr.bf16.mxu0 0
    %1946 = vmatpush1.bf16.msra.mxu0 %v1562
    %1947 = vmatprep.subr.bf16.mxu0 0
    %1948 = vmatpush1.bf16.msra.mxu0 %v1561
    %1949 = vmatprep.subr.bf16.mxu0 0
    %1950 = vmatpush1.bf16.msra.mxu0 %v1560
    %1951 = vmatprep.subr.bf16.mxu0 0
    %1952 = vmatpush1.bf16.msra.mxu0 %v1559
    %1953 = vmatprep.subr.bf16.mxu0 0
    %1954 = vmatpush1.bf16.msra.mxu0 %v1558
    %1955 = vmatprep.subr.bf16.mxu0 0
    %1956 = vmatpush2.bf16.msra.mxu0 %v1573
    %1957 = vmatprep.subr.bf16.mxu0 0
    %1958 = vmatpush2.bf16.msra.mxu0 %v1572
    %1959 = vmatprep.subr.bf16.mxu0 0
    %1960 = vmatpush2.bf16.msra.mxu0 %v1571
    %1961 = vmatprep.subr.bf16.mxu0 0
    %1962 = vmatpush2.bf16.msra.mxu0 %v1570
    %1963 = vmatprep.subr.bf16.mxu0 0
    %1964 = vmatpush2.bf16.msra.mxu0 %v1569
    %1965 = vmatprep.subr.bf16.mxu0 0
    %1966 = vmatpush2.bf16.msra.mxu0 %v1568
    %1967 = vmatprep.subr.bf16.mxu0 0
    %1968 = vmatpush2.bf16.msra.mxu0 %v1567
    %1969 = vmatprep.subr.bf16.mxu0 0
    %1970 = vmatpush2.bf16.msra.mxu0 %v1566
    %1971 = vmatprep.mubr.bf16.mxu0 %v705
    %1972 = vmatmul.mubr.bf16.gmra.mxu0 %v704
    %v1973 = vpop.f32.mrf.mxu0
    %v1974 = vadd.f32 %v1933, %v1973
    %v1975 = vpop.f32.mrf.mxu0
    %v1976 = vpop.f32.mrf.mxu0
    %v1977 = vadd.f32 %v1936, %v1976
    %v1978 = vpop.f32.mrf.mxu0
    %1979 = vdwg.mxu0
    %1980 = vmatprep.subr.bf16.mxu0 0
    %1981 = vmatpush1.bf16.msra.mxu0 %v1581
    %1982 = vmatprep.subr.bf16.mxu0 0
    %1983 = vmatpush1.bf16.msra.mxu0 %v1580
    %1984 = vmatprep.subr.bf16.mxu0 0
    %1985 = vmatpush1.bf16.msra.mxu0 %v1579
    %1986 = vmatprep.subr.bf16.mxu0 0
    %1987 = vmatpush1.bf16.msra.mxu0 %v1578
    %1988 = vmatprep.subr.bf16.mxu0 0
    %1989 = vmatpush1.bf16.msra.mxu0 %v1577
    %1990 = vmatprep.subr.bf16.mxu0 0
    %1991 = vmatpush1.bf16.msra.mxu0 %v1576
    %1992 = vmatprep.subr.bf16.mxu0 0
    %1993 = vmatpush1.bf16.msra.mxu0 %v1575
    %1994 = vmatprep.subr.bf16.mxu0 0
    %1995 = vmatpush1.bf16.msra.mxu0 %v1574
    %1996 = vmatprep.subr.bf16.mxu0 0
    %1997 = vmatpush2.bf16.msra.mxu0 %v1589
    %1998 = vmatprep.subr.bf16.mxu0 0
    %1999 = vmatpush2.bf16.msra.mxu0 %v1588
    %2000 = vmatprep.subr.bf16.mxu0 0
    %2001 = vmatpush2.bf16.msra.mxu0 %v1587
    %2002 = vmatprep.subr.bf16.mxu0 0
    %2003 = vmatpush2.bf16.msra.mxu0 %v1586
    %2004 = vmatprep.subr.bf16.mxu0 0
    %2005 = vmatpush2.bf16.msra.mxu0 %v1585
    %2006 = vmatprep.subr.bf16.mxu0 0
    %2007 = vmatpush2.bf16.msra.mxu0 %v1584
    %2008 = vmatprep.subr.bf16.mxu0 0
    %2009 = vmatpush2.bf16.msra.mxu0 %v1583
    %2010 = vmatprep.subr.bf16.mxu0 0
    %2011 = vmatpush2.bf16.msra.mxu0 %v1582
    %2012 = vmatprep.mubr.bf16.mxu0 %v707
    %2013 = vmatmul.mubr.bf16.gmra.mxu0 %v706
    %v2014 = vpop.f32.mrf.mxu0
    %v2015 = vadd.f32 %v1974, %v2014
    %v2016 = vpop.f32.mrf.mxu0
    %v2017 = vpop.f32.mrf.mxu0
    %v2018 = vadd.f32 %v1977, %v2017
    %v2019 = vpop.f32.mrf.mxu0
    %2020 = vdwg.mxu0
    %2021 = vmatprep.subr.bf16.mxu0 0
    %2022 = vmatpush1.bf16.msra.mxu0 %v1597
    %2023 = vmatprep.subr.bf16.mxu0 0
    %2024 = vmatpush1.bf16.msra.mxu0 %v1596
    %2025 = vmatprep.subr.bf16.mxu0 0
    %2026 = vmatpush1.bf16.msra.mxu0 %v1595
    %2027 = vmatprep.subr.bf16.mxu0 0
    %2028 = vmatpush1.bf16.msra.mxu0 %v1594
    %2029 = vmatprep.subr.bf16.mxu0 0
    %2030 = vmatpush1.bf16.msra.mxu0 %v1593
    %2031 = vmatprep.subr.bf16.mxu0 0
    %2032 = vmatpush1.bf16.msra.mxu0 %v1592
    %2033 = vmatprep.subr.bf16.mxu0 0
    %2034 = vmatpush1.bf16.msra.mxu0 %v1591
    %2035 = vmatprep.subr.bf16.mxu0 0
    %2036 = vmatpush1.bf16.msra.mxu0 %v1590
    %2037 = vmatprep.subr.bf16.mxu0 0
    %2038 = vmatpush2.bf16.msra.mxu0 %v1605
    %2039 = vmatprep.subr.bf16.mxu0 0
    %2040 = vmatpush2.bf16.msra.mxu0 %v1604
    %2041 = vmatprep.subr.bf16.mxu0 0
    %2042 = vmatpush2.bf16.msra.mxu0 %v1603
    %2043 = vmatprep.subr.bf16.mxu0 0
    %2044 = vmatpush2.bf16.msra.mxu0 %v1602
    %2045 = vmatprep.subr.bf16.mxu0 0
    %2046 = vmatpush2.bf16.msra.mxu0 %v1601
    %2047 = vmatprep.subr.bf16.mxu0 0
    %2048 = vmatpush2.bf16.msra.mxu0 %v1600
    %2049 = vmatprep.subr.bf16.mxu0 0
    %2050 = vmatpush2.bf16.msra.mxu0 %v1599
    %2051 = vmatprep.subr.bf16.mxu0 0
    %2052 = vmatpush2.bf16.msra.mxu0 %v1598
    %2053 = vmatprep.mubr.bf16.mxu0 %v709
    %2054 = vmatmul.mubr.bf16.gmra.mxu0 %v708
    %v2055 = vpop.f32.mrf.mxu0
    %v2056 = vadd.f32 %v2015, %v2055
    %v2057 = vpop.f32.mrf.mxu0
    %v2058 = vpop.f32.mrf.mxu0
    %v2059 = vadd.f32 %v2018, %v2058
    %v2060 = vpop.f32.mrf.mxu0
    %2061 = vdwg.mxu0
    %v2062 = vadd.f32 %v692, %v2056
    %v2063 = vadd.f32 %v693, %v2059
    %2064 = vst.msk [vmem:[#allocation2] sm:$0xff] %vm312, %v2062
    %2065 = vst.msk [vmem:[#allocation2 + $0x8] sm:$0xff] %vm312, %v2063
    // Predicated region
    $region26: #{tpu_custom_call.1} parent=1 // pred_check
      %p2066 = pneg %p22
    $region27: #{tpu_custom_call.1} parent=1 // pred_check_branch
      %2068 = sbr.rel (%p2066) target = $region29
    $region28: #{tpu_custom_call.1} parent=1 // pred_region
      %v2069 = vld [vmem:[#allocation2] sm:$0xff]
      %v2070 = vld [vmem:[#allocation2 + $0x8] sm:$0xff]
      %v2071 = vld [vmem:[%s4] sm:$0x1]
      %v2073 = vlaneseq
      %v2074 = vshrl.u32 %v2073, 7
      %v2075 = vsub.s32 0, %v2074
      %v2076 = vrot.slane %v2071, %v2075
      %v2078 = vadd.f32 %v2069, %v2076
      %v2079 = vadd.f32 %v2070, %v2076
      %2080 = vst.msk [vmem:[#allocation3] sm:$0xff] %vm312, %v2078
      %2081 = vst.msk [vmem:[#allocation3 + $0x8] sm:$0xff] %vm312, %v2079
    $region29: #{tpu_custom_call.1} parent=1 // pred_fallthru
      _
    // Predicated region
    $region30: #{tpu_custom_call.1} parent=1 // pred_check
      _
    $region31: #{tpu_custom_call.1} parent=1 // pred_check_branch
      %2083 = sbr.rel (0) target = $region33
    $region32: #{tpu_custom_call.1} parent=1 // pred_region
      %s2085 = ssub.s32 256, 256
      %2086 = vsyncadd [#allocation4], %s2085
      %s2087 = sshll.u32 [#allocation3], 4
      %s2088 = int_to_ptr.vmem [resolvable:$true] %s2087
      %2093 = dma.vmem_to_hbm [thread:$0]  %s2088, 256, %s5, [#allocation4], 128, 128, 8
    $region33: #{tpu_custom_call.1} parent=1 // pred_fallthru
      _
    // Predicated region
    $region34: #{tpu_custom_call.1} parent=1 // pred_check
      _
    $region35: #{tpu_custom_call.1} parent=1 // pred_check_branch
      %2095 = sbr.rel (0) target = $region37
    $region36: #{tpu_custom_call.1} parent=1 // pred_region
      %2096 = dma.done [#allocation4], 256
    $region37: #{tpu_custom_call.1} parent=1 // pred_fallthru
      _
    %2097 = vsyncpa [#allocation4], 1

</llo_original>
